<compile_context>
chip_gen: v5e
topology: v5e:2x2
jax: 0.10.0
libtpu: 0.0.40
codegen_flags: <defaults>
</compile_context>

<pallas_src>
import math

import jax
import jax.numpy as jnp
from jax.experimental import pallas as pl
from jax.experimental.pallas import tpu as pltpu

# ---- "config" (small, deterministic, consistent with the module) -----------
H = 32            # config.transformer_hidden_size
NH = 4            # number of attention heads
HD = H // NH      # head dim
FF = 4 * H        # FFN inner size
B = 2             # batch
S_DEC = 8         # decoder sequence length
S_ENC = 16        # encoder sequence length
M = B * S_DEC     # flattened decoder tokens
LN_EPS = 1e-5     # nn.LayerNorm default eps
NEG_INF = -1e9


# =============================================================================
# Pallas kernel: the full decoder layer, whole batch, single invocation.
# =============================================================================
def decoder_layer_kernel(
    lens_ref,                 # SMEM (B,) int32 — encoder keep lengths
    x_ref, enc_ref, hm_ref,   # VMEM (B,S_DEC,H) / (B,S_ENC,H) f32 / (NH,1,H) f32
    # masked self-attention
    sq_w, sq_b, sk_w, sk_b, sv_w, sv_b, so_w, so_b,
    # enc/dec cross-attention
    cq_w, cq_b, ck_w, ck_b, cv_w, cv_b, co_w, co_b,
    # shared LayerNorm
    ln_g, ln_b,
    # feed-forward
    w1, b1, w2, b2,
    out_ref,
):
    f32 = jnp.float32
    bf16 = jnp.bfloat16
    scale = 1.0 / math.sqrt(HD)

    x = x_ref[...].reshape(M, H)                 # (M, H) f32
    enc = enc_ref[...].reshape(B * S_ENC, H)     # (B*S_ENC, H) f32
    hm = hm_ref[...]                             # (NH, 1, H) f32 head-lane masks
    gamma = ln_g[...]
    beta = ln_b[...]

    def layernorm(t):                            # f32; one-pass variance
        mu = jnp.mean(t, axis=-1, keepdims=True)
        ms = jnp.mean(t * t, axis=-1, keepdims=True)
        var = ms - mu * mu
        return (t - mu) * jax.lax.rsqrt(var + LN_EPS) * gamma + beta

    def softmax(s):                              # f32, exact divide (parity)
        m = jnp.max(s, axis=-1, keepdims=True)
        e = jnp.exp(s - m)
        return e / jnp.sum(e, axis=-1, keepdims=True)

    def proj(a_bf, w_ref, b_ref):                # flat matmul + bias
        return jnp.dot(a_bf, w_ref[...], preferred_element_type=f32) + b_ref[...]

    def mha(q, k, v, s_kv, add_mask, wo_ref, bo_ref):
        # q: (M, H) f32, k/v: (B*s_kv, H) f32.  Head h is selected by zeroing
        # all lanes outside [h*HD, (h+1)*HD) — exact, no relayout needed.
        k3 = k.reshape(B, s_kv, H).astype(bf16)
        parts = []
        for h in range(NH):                      # unrolled; heads independent
            m_h = hm[h]                          # (1, H)
            qh = (q * m_h).reshape(B, S_DEC, H).astype(bf16)
            vh = (v * m_h).reshape(B, s_kv, H).astype(bf16)
            s = jnp.einsum('bqc,bkc->bqk', qh, k3,
                           preferred_element_type=f32) * scale
            if add_mask is not None:
                s = s + add_mask                 # (B,1,s_kv) additive, f32
            p = softmax(s).astype(bf16)
            # head-h context lands in its natural lanes; other lanes are 0.
            parts.append(jnp.einsum('bqk,bkc->bqc', p, vh,
                                    preferred_element_type=f32))
        while len(parts) > 1:                    # pairwise tree-sum
            parts = [parts[i] + parts[i + 1] if i + 1 < len(parts) else parts[i]
                     for i in range(0, len(parts), 2)]
        ctx = parts[0].reshape(M, H).astype(bf16)
        return jnp.dot(ctx, wo_ref[...], preferred_element_type=f32) + bo_ref[...]

    # ---- masked self-attention (module passes attention_mask=None) ---------
    x_bf = x.astype(bf16)
    q = proj(x_bf, sq_w, sq_b)
    k = proj(x_bf, sk_w, sk_b)
    v = proj(x_bf, sv_w, sv_b)
    h1 = layernorm(x + mha(q, k, v, S_DEC, None, so_w, so_b))

    # ---- enc/dec cross-attention with in-kernel key-padding mask -----------
    key_pos = jax.lax.broadcasted_iota(jnp.int32, (B, 1, S_ENC), 2)
    b_idx = jax.lax.broadcasted_iota(jnp.int32, (B, 1, S_ENC), 0)
    lens = jnp.full((B, 1, S_ENC), lens_ref[0], jnp.int32)
    for b in range(1, B):
        lens = jnp.where(b_idx == b, lens_ref[b], lens)
    add_mask = jnp.where(key_pos < lens, 0.0, NEG_INF).astype(f32)

    h1_bf = h1.astype(bf16)
    enc_bf = enc.astype(bf16)
    cq = proj(h1_bf, cq_w, cq_b)
    ck = proj(enc_bf, ck_w, ck_b)
    cv = proj(enc_bf, cv_w, cv_b)
    h2 = layernorm(h1 + mha(cq, ck, cv, S_ENC, add_mask, co_w, co_b))

    # ---- feed-forward -------------------------------------------------------
    ff = jnp.maximum(proj(h2.astype(bf16), w1, b1), 0.0)
    ff = proj(ff.astype(bf16), w2, b2)
    out_ref[...] = layernorm(h2 + ff).reshape(B, S_DEC, H)


# =============================================================================
# Wrapper: cast matmul weights to bf16, build head-lane masks, launch.
# =============================================================================
def decoder_layer(x, enc, keep_lens, params):
    bf = lambda a: a.astype(jnp.bfloat16)

    lane = jnp.arange(H, dtype=jnp.int32)
    head_masks = (lane[None, :] // HD
                  == jnp.arange(NH, dtype=jnp.int32)[:, None]).astype(jnp.float32)
    head_masks = head_masks.reshape(NH, 1, H)

    args = [
        x, enc, head_masks,
        bf(params["sq_w"]), params["sq_b"], bf(params["sk_w"]), params["sk_b"],
        bf(params["sv_w"]), params["sv_b"], bf(params["so_w"]), params["so_b"],
        bf(params["cq_w"]), params["cq_b"], bf(params["ck_w"]), params["ck_b"],
        bf(params["cv_w"]), params["cv_b"], bf(params["co_w"]), params["co_b"],
        params["ln_g"], params["ln_b"],
        bf(params["w1"]), params["b1"], bf(params["w2"]), params["b2"],
    ]

    mm = lambda m, kk, n: 2 * m * kk * n
    flops = (6 * mm(M, H, H)                         # self q/k/v/out, cross q/out
             + 2 * mm(B * S_ENC, H, H)               # cross k/v
             + 2 * 2 * NH * B * S_DEC * S_DEC * HD   # self scores + ctx
             + 2 * 2 * NH * B * S_DEC * S_ENC * HD   # cross scores + ctx
             + mm(M, H, FF) + mm(M, FF, H))          # FFN
    transcendentals = NH * B * S_DEC * (S_DEC + S_ENC) + 3 * M
    bytes_accessed = (sum(int(a.size) * a.dtype.itemsize for a in args)
                      + int(keep_lens.size) * 4 + M * H * 4)

    vmem = pl.BlockSpec(memory_space=pltpu.MemorySpace.VMEM)
    smem = pl.BlockSpec(memory_space=pltpu.MemorySpace.SMEM)

    return pl.pallas_call(
        decoder_layer_kernel,
        out_shape=jax.ShapeDtypeStruct((B, S_DEC, H), jnp.float32),
        in_specs=[smem] + [vmem] * len(args),
        out_specs=vmem,
        cost_estimate=pl.CostEstimate(flops=int(flops),
                                      transcendentals=int(transcendentals),
                                      bytes_accessed=int(bytes_accessed)),
    )(keep_lens.astype(jnp.int32), *args)


# =============================================================================
# Pure-JAX f32 reference (same math as the PyTorch module).
# =============================================================================
def _layernorm_ref(x, gamma, beta):
    mu = jnp.mean(x, axis=-1, keepdims=True)
    var = jnp.mean((x - mu) ** 2, axis=-1, keepdims=True)
    return (x - mu) * jax.lax.rsqrt(var + LN_EPS) * gamma + beta


def _mha_ref(xq, xkv, mask, wq, bq, wk, bk, wv, bv, wo, bo):
    q = xq @ wq + bq
    k = xkv @ wk + bk
    v = xkv @ wv + bv
    scale = 1.0 / math.sqrt(HD)
    ctxs = []
    for h in range(NH):
        qh = q[:, h * HD:(h + 1) * HD]
        kh = k[:, h * HD:(h + 1) * HD]
        vh = v[:, h * HD:(h + 1) * HD]
        scores = qh @ kh.T * scale
        if mask is not None:
            scores = scores + mask
        m = jnp.max(scores, axis=-1, keepdims=True)
        e = jnp.exp(scores - m)
        p = e / jnp.sum(e, axis=-1, keepdims=True)
        ctxs.append(p @ vh)
    ctx = jnp.concatenate(ctxs, axis=-1)
    return ctx @ wo + bo


def reference(x, enc, keep_lens, p):
    key_pos = jnp.arange(S_ENC)[None, :]
    outs = []
    for b in range(x.shape[0]):
        xb, eb = x[b], enc[b]
        mb = jnp.where(key_pos < keep_lens[b], 0.0, NEG_INF).astype(jnp.float32)
        mb = jnp.broadcast_to(mb, (S_DEC, S_ENC))
        sa = _mha_ref(xb, xb, None,
                      p["sq_w"], p["sq_b"], p["sk_w"], p["sk_b"],
                      p["sv_w"], p["sv_b"], p["so_w"], p["so_b"])
        h1 = _layernorm_ref(xb + sa, p["ln_g"], p["ln_b"])
        ca = _mha_ref(h1, eb, mb,
                      p["cq_w"], p["cq_b"], p["ck_w"], p["ck_b"],
                      p["cv_w"], p["cv_b"], p["co_w"], p["co_b"])
        h2 = _layernorm_ref(h1 + ca, p["ln_g"], p["ln_b"])
        ff = jnp.maximum(h2 @ p["w1"] + p["b1"], 0.0) @ p["w2"] + p["b2"]
        outs.append(_layernorm_ref(h2 + ff, p["ln_g"], p["ln_b"]))
    return jnp.stack(outs, axis=0)


def init_params(key):
    keys = iter(jax.random.split(key, 64))

    def w(shape, scale=0.05):
        return (scale * jax.random.normal(next(keys), shape)).astype(jnp.float32)

    params = {}
    for pfx in ("s", "c"):
        for name in ("q", "k", "v", "o"):
            params[f"{pfx}{name}_w"] = w((H, H))
            params[f"{pfx}{name}_b"] = w((1, H))
    params["ln_g"] = (1.0 + 0.1 * jax.random.normal(next(keys), (1, H))
                      ).astype(jnp.float32)
    params["ln_b"] = w((1, H))
    params["w1"] = w((H, FF))
    params["b1"] = w((1, FF))
    params["w2"] = w((FF, H))
    params["b2"] = w((1, H))
    return params


if __name__ == "__main__":
    root = jax.random.PRNGKey(0)
    kx, ke, kp = jax.random.split(root, 3)

    x = jax.random.normal(kx, (B, S_DEC, H), dtype=jnp.float32)
    enc = jax.random.normal(ke, (B, S_ENC, H), dtype=jnp.float32)
    # enc_attention_mask as a keep-first-N key-padding mask; the kernel
    # rebuilds the additive form in-kernel from these scalars.
    keep_lens = jnp.array([12, 9], dtype=jnp.int32)

    params = init_params(kp)

    out = jax.block_until_ready(decoder_layer(x, enc, keep_lens, params))
    ref = reference(x, enc, keep_lens, params)

    assert out.shape == (B, S_DEC, H)
    assert bool(jnp.all(jnp.isfinite(out)))
    # bf16 matmul operands (f32 accumulation) vs. pure-f32 reference.
    assert jnp.allclose(out, ref, atol=2e-2, rtol=2e-2), (
        f"max abs diff {jnp.max(jnp.abs(out - ref))}")

    print("KERNEL_OK")
</pallas_src>

<mosaic_0001>
module attributes {stable_mosaic.version = 11 : i64} {
  func.func @decoder_layer_kernel(%arg0: memref<2xi32, #tpu.memory_space<smem>>, %arg1: memref<2x8x32xf32, #tpu.memory_space<vmem>>, %arg2: memref<2x16x32xf32, #tpu.memory_space<vmem>>, %arg3: memref<4x1x32xf32, #tpu.memory_space<vmem>>, %arg4: memref<32x32xbf16, #tpu.memory_space<vmem>>, %arg5: memref<1x32xf32, #tpu.memory_space<vmem>>, %arg6: memref<32x32xbf16, #tpu.memory_space<vmem>>, %arg7: memref<1x32xf32, #tpu.memory_space<vmem>>, %arg8: memref<32x32xbf16, #tpu.memory_space<vmem>>, %arg9: memref<1x32xf32, #tpu.memory_space<vmem>>, %arg10: memref<32x32xbf16, #tpu.memory_space<vmem>>, %arg11: memref<1x32xf32, #tpu.memory_space<vmem>>, %arg12: memref<32x32xbf16, #tpu.memory_space<vmem>>, %arg13: memref<1x32xf32, #tpu.memory_space<vmem>>, %arg14: memref<32x32xbf16, #tpu.memory_space<vmem>>, %arg15: memref<1x32xf32, #tpu.memory_space<vmem>>, %arg16: memref<32x32xbf16, #tpu.memory_space<vmem>>, %arg17: memref<1x32xf32, #tpu.memory_space<vmem>>, %arg18: memref<32x32xbf16, #tpu.memory_space<vmem>>, %arg19: memref<1x32xf32, #tpu.memory_space<vmem>>, %arg20: memref<1x32xf32, #tpu.memory_space<vmem>>, %arg21: memref<1x32xf32, #tpu.memory_space<vmem>>, %arg22: memref<32x128xbf16, #tpu.memory_space<vmem>>, %arg23: memref<1x128xf32, #tpu.memory_space<vmem>>, %arg24: memref<128x32xbf16, #tpu.memory_space<vmem>>, %arg25: memref<1x32xf32, #tpu.memory_space<vmem>>, %arg26: memref<2x8x32xf32, #tpu.memory_space<vmem>>) attributes {dimension_semantics = [], scalar_prefetch = 0 : i64, scratch_operands = 0 : i64, tpu.core_type = #tpu.core_type<tc>} {
    %c0 = arith.constant 0 : index
    %c0_0 = arith.constant 0 : index
    %c0_1 = arith.constant 0 : index
    %0 = vector.load %arg1[%c0, %c0_0, %c0_1] : memref<2x8x32xf32, #tpu.memory_space<vmem>>, vector<2x8x32xf32>
    %1 = vector.shape_cast %0 : vector<2x8x32xf32> to vector<16x32xf32>
    %c0_2 = arith.constant 0 : index
    %c0_3 = arith.constant 0 : index
    %c0_4 = arith.constant 0 : index
    %2 = vector.load %arg2[%c0_2, %c0_3, %c0_4] : memref<2x16x32xf32, #tpu.memory_space<vmem>>, vector<2x16x32xf32>
    %3 = vector.shape_cast %2 : vector<2x16x32xf32> to vector<32x32xf32>
    %c0_5 = arith.constant 0 : index
    %c0_6 = arith.constant 0 : index
    %c0_7 = arith.constant 0 : index
    %4 = vector.load %arg3[%c0_5, %c0_6, %c0_7] : memref<4x1x32xf32, #tpu.memory_space<vmem>>, vector<4x1x32xf32>
    %c0_8 = arith.constant 0 : index
    %c0_9 = arith.constant 0 : index
    %5 = vector.load %arg20[%c0_8, %c0_9] : memref<1x32xf32, #tpu.memory_space<vmem>>, vector<1x32xf32>
    %c0_10 = arith.constant 0 : index
    %c0_11 = arith.constant 0 : index
    %6 = vector.load %arg21[%c0_10, %c0_11] : memref<1x32xf32, #tpu.memory_space<vmem>>, vector<1x32xf32>
    %7 = arith.truncf %1 : vector<16x32xf32> to vector<16x32xbf16>
    %c0_12 = arith.constant 0 : index
    %c0_13 = arith.constant 0 : index
    %8 = vector.load %arg4[%c0_12, %c0_13] : memref<32x32xbf16, #tpu.memory_space<vmem>>, vector<32x32xbf16>
    %cst = arith.constant dense<0.000000e+00> : vector<16x32xf32>
    %9 = tpu.matmul %7, %8, %cst {dimension_numbers = #tpu.dot_dimension_numbers<[1], [0], [0], [1], [0, 0, 1, 1], [], []>} : vector<16x32xbf16>, vector<32x32xbf16>, vector<16x32xf32> -> vector<16x32xf32>
    %c0_14 = arith.constant 0 : index
    %c0_15 = arith.constant 0 : index
    %10 = vector.load %arg5[%c0_14, %c0_15] : memref<1x32xf32, #tpu.memory_space<vmem>>, vector<1x32xf32>
    %11 = vector.broadcast %10 : vector<1x32xf32> to vector<16x32xf32>
    %12 = arith.addf %9, %11 : vector<16x32xf32>
    %c0_16 = arith.constant 0 : index
    %c0_17 = arith.constant 0 : index
    %13 = vector.load %arg6[%c0_16, %c0_17] : memref<32x32xbf16, #tpu.memory_space<vmem>>, vector<32x32xbf16>
    %cst_18 = arith.constant dense<0.000000e+00> : vector<16x32xf32>
    %14 = tpu.matmul %7, %13, %cst_18 {dimension_numbers = #tpu.dot_dimension_numbers<[1], [0], [0], [1], [0, 0, 1, 1], [], []>} : vector<16x32xbf16>, vector<32x32xbf16>, vector<16x32xf32> -> vector<16x32xf32>
    %c0_19 = arith.constant 0 : index
    %c0_20 = arith.constant 0 : index
    %15 = vector.load %arg7[%c0_19, %c0_20] : memref<1x32xf32, #tpu.memory_space<vmem>>, vector<1x32xf32>
    %16 = vector.broadcast %15 : vector<1x32xf32> to vector<16x32xf32>
    %17 = arith.addf %14, %16 : vector<16x32xf32>
    %c0_21 = arith.constant 0 : index
    %c0_22 = arith.constant 0 : index
    %18 = vector.load %arg8[%c0_21, %c0_22] : memref<32x32xbf16, #tpu.memory_space<vmem>>, vector<32x32xbf16>
    %cst_23 = arith.constant dense<0.000000e+00> : vector<16x32xf32>
    %19 = tpu.matmul %7, %18, %cst_23 {dimension_numbers = #tpu.dot_dimension_numbers<[1], [0], [0], [1], [0, 0, 1, 1], [], []>} : vector<16x32xbf16>, vector<32x32xbf16>, vector<16x32xf32> -> vector<16x32xf32>
    %c0_24 = arith.constant 0 : index
    %c0_25 = arith.constant 0 : index
    %20 = vector.load %arg9[%c0_24, %c0_25] : memref<1x32xf32, #tpu.memory_space<vmem>>, vector<1x32xf32>
    %21 = vector.broadcast %20 : vector<1x32xf32> to vector<16x32xf32>
    %22 = arith.addf %19, %21 : vector<16x32xf32>
    %23 = vector.shape_cast %17 : vector<16x32xf32> to vector<2x8x32xf32>
    %24 = arith.truncf %23 : vector<2x8x32xf32> to vector<2x8x32xbf16>
    %25 = vector.extract_strided_slice %4 {offsets = [0, 0, 0], sizes = [1, 1, 32], strides = [1, 1, 1]} : vector<4x1x32xf32> to vector<1x1x32xf32>
    %26 = vector.shape_cast %25 : vector<1x1x32xf32> to vector<1x32xf32>
    %27 = vector.broadcast %26 : vector<1x32xf32> to vector<16x32xf32>
    %28 = arith.mulf %12, %27 : vector<16x32xf32>
    %29 = vector.shape_cast %28 : vector<16x32xf32> to vector<2x8x32xf32>
    %30 = arith.truncf %29 : vector<2x8x32xf32> to vector<2x8x32xbf16>
    %31 = vector.broadcast %26 : vector<1x32xf32> to vector<16x32xf32>
    %32 = arith.mulf %22, %31 : vector<16x32xf32>
    %33 = vector.shape_cast %32 : vector<16x32xf32> to vector<2x8x32xf32>
    %34 = arith.truncf %33 : vector<2x8x32xf32> to vector<2x8x32xbf16>
    "tpu.trace_start"() <{level = 10 : i32, message = "bqc,bkc->bqk"}> : () -> ()
    %cst_26 = arith.constant dense<0.000000e+00> : vector<2x8x8xf32>
    %35 = tpu.matmul %30, %24, %cst_26 {dimension_numbers = #tpu.dot_dimension_numbers<[2], [2], [1], [1], [0, 0, 0, 1, 1, 1], [0], [0]>} : vector<2x8x32xbf16>, vector<2x8x32xbf16>, vector<2x8x8xf32> -> vector<2x8x8xf32>
    "tpu.trace_stop"() : () -> ()
    %cst_27 = arith.constant 0.353553385 : f32
    %36 = vector.broadcast %cst_27 : f32 to vector<2x8x8xf32>
    %37 = arith.mulf %35, %36 : vector<2x8x8xf32>
    %cst_28 = arith.constant dense<0xFF800000> : vector<2x8xf32>
    %38 = vector.multi_reduction <maximumf>, %37, %cst_28 [2] : vector<2x8x8xf32> to vector<2x8xf32>
    %39 = vector.shape_cast %38 : vector<2x8xf32> to vector<2x8x1xf32>
    %40 = vector.broadcast %39 : vector<2x8x1xf32> to vector<2x8x8xf32>
    %41 = arith.subf %37, %40 : vector<2x8x8xf32>
    %42 = math.exp %41 : vector<2x8x8xf32>
    %cst_29 = arith.constant dense<0.000000e+00> : vector<2x8xf32>
    %43 = vector.multi_reduction <add>, %42, %cst_29 [2] : vector<2x8x8xf32> to vector<2x8xf32>
    %44 = vector.shape_cast %43 : vector<2x8xf32> to vector<2x8x1xf32>
    %45 = vector.broadcast %44 : vector<2x8x1xf32> to vector<2x8x8xf32>
    %46 = arith.divf %42, %45 : vector<2x8x8xf32>
    %47 = arith.truncf %46 : vector<2x8x8xf32> to vector<2x8x8xbf16>
    "tpu.trace_start"() <{level = 10 : i32, message = "bqk,bkc->bqc"}> : () -> ()
    %cst_30 = arith.constant dense<0.000000e+00> : vector<2x8x32xf32>
    %48 = tpu.matmul %47, %34, %cst_30 {dimension_numbers = #tpu.dot_dimension_numbers<[2], [1], [1], [2], [0, 0, 0, 1, 1, 2], [0], [0]>} : vector<2x8x8xbf16>, vector<2x8x32xbf16>, vector<2x8x32xf32> -> vector<2x8x32xf32>
    "tpu.trace_stop"() : () -> ()
    %49 = vector.extract_strided_slice %4 {offsets = [1, 0, 0], sizes = [1, 1, 32], strides = [1, 1, 1]} : vector<4x1x32xf32> to vector<1x1x32xf32>
    %50 = vector.shape_cast %49 : vector<1x1x32xf32> to vector<1x32xf32>
    %51 = vector.broadcast %50 : vector<1x32xf32> to vector<16x32xf32>
    %52 = arith.mulf %12, %51 : vector<16x32xf32>
    %53 = vector.shape_cast %52 : vector<16x32xf32> to vector<2x8x32xf32>
    %54 = arith.truncf %53 : vector<2x8x32xf32> to vector<2x8x32xbf16>
    %55 = vector.broadcast %50 : vector<1x32xf32> to vector<16x32xf32>
    %56 = arith.mulf %22, %55 : vector<16x32xf32>
    %57 = vector.shape_cast %56 : vector<16x32xf32> to vector<2x8x32xf32>
    %58 = arith.truncf %57 : vector<2x8x32xf32> to vector<2x8x32xbf16>
    "tpu.trace_start"() <{level = 10 : i32, message = "bqc,bkc->bqk"}> : () -> ()
    %cst_31 = arith.constant dense<0.000000e+00> : vector<2x8x8xf32>
    %59 = tpu.matmul %54, %24, %cst_31 {dimension_numbers = #tpu.dot_dimension_numbers<[2], [2], [1], [1], [0, 0, 0, 1, 1, 1], [0], [0]>} : vector<2x8x32xbf16>, vector<2x8x32xbf16>, vector<2x8x8xf32> -> vector<2x8x8xf32>
    "tpu.trace_stop"() : () -> ()
    %cst_32 = arith.constant 0.353553385 : f32
    %60 = vector.broadcast %cst_32 : f32 to vector<2x8x8xf32>
    %61 = arith.mulf %59, %60 : vector<2x8x8xf32>
    %cst_33 = arith.constant dense<0xFF800000> : vector<2x8xf32>
    %62 = vector.multi_reduction <maximumf>, %61, %cst_33 [2] : vector<2x8x8xf32> to vector<2x8xf32>
    %63 = vector.shape_cast %62 : vector<2x8xf32> to vector<2x8x1xf32>
    %64 = vector.broadcast %63 : vector<2x8x1xf32> to vector<2x8x8xf32>
    %65 = arith.subf %61, %64 : vector<2x8x8xf32>
    %66 = math.exp %65 : vector<2x8x8xf32>
    %cst_34 = arith.constant dense<0.000000e+00> : vector<2x8xf32>
    %67 = vector.multi_reduction <add>, %66, %cst_34 [2] : vector<2x8x8xf32> to vector<2x8xf32>
    %68 = vector.shape_cast %67 : vector<2x8xf32> to vector<2x8x1xf32>
    %69 = vector.broadcast %68 : vector<2x8x1xf32> to vector<2x8x8xf32>
    %70 = arith.divf %66, %69 : vector<2x8x8xf32>
    %71 = arith.truncf %70 : vector<2x8x8xf32> to vector<2x8x8xbf16>
    "tpu.trace_start"() <{level = 10 : i32, message = "bqk,bkc->bqc"}> : () -> ()
    %cst_35 = arith.constant dense<0.000000e+00> : vector<2x8x32xf32>
    %72 = tpu.matmul %71, %58, %cst_35 {dimension_numbers = #tpu.dot_dimension_numbers<[2], [1], [1], [2], [0, 0, 0, 1, 1, 2], [0], [0]>} : vector<2x8x8xbf16>, vector<2x8x32xbf16>, vector<2x8x32xf32> -> vector<2x8x32xf32>
    "tpu.trace_stop"() : () -> ()
    %73 = vector.extract_strided_slice %4 {offsets = [2, 0, 0], sizes = [1, 1, 32], strides = [1, 1, 1]} : vector<4x1x32xf32> to vector<1x1x32xf32>
    %74 = vector.shape_cast %73 : vector<1x1x32xf32> to vector<1x32xf32>
    %75 = vector.broadcast %74 : vector<1x32xf32> to vector<16x32xf32>
    %76 = arith.mulf %12, %75 : vector<16x32xf32>
    %77 = vector.shape_cast %76 : vector<16x32xf32> to vector<2x8x32xf32>
    %78 = arith.truncf %77 : vector<2x8x32xf32> to vector<2x8x32xbf16>
    %79 = vector.broadcast %74 : vector<1x32xf32> to vector<16x32xf32>
    %80 = arith.mulf %22, %79 : vector<16x32xf32>
    %81 = vector.shape_cast %80 : vector<16x32xf32> to vector<2x8x32xf32>
    %82 = arith.truncf %81 : vector<2x8x32xf32> to vector<2x8x32xbf16>
    "tpu.trace_start"() <{level = 10 : i32, message = "bqc,bkc->bqk"}> : () -> ()
    %cst_36 = arith.constant dense<0.000000e+00> : vector<2x8x8xf32>
    %83 = tpu.matmul %78, %24, %cst_36 {dimension_numbers = #tpu.dot_dimension_numbers<[2], [2], [1], [1], [0, 0, 0, 1, 1, 1], [0], [0]>} : vector<2x8x32xbf16>, vector<2x8x32xbf16>, vector<2x8x8xf32> -> vector<2x8x8xf32>
    "tpu.trace_stop"() : () -> ()
    %cst_37 = arith.constant 0.353553385 : f32
    %84 = vector.broadcast %cst_37 : f32 to vector<2x8x8xf32>
    %85 = arith.mulf %83, %84 : vector<2x8x8xf32>
    %cst_38 = arith.constant dense<0xFF800000> : vector<2x8xf32>
    %86 = vector.multi_reduction <maximumf>, %85, %cst_38 [2] : vector<2x8x8xf32> to vector<2x8xf32>
    %87 = vector.shape_cast %86 : vector<2x8xf32> to vector<2x8x1xf32>
    %88 = vector.broadcast %87 : vector<2x8x1xf32> to vector<2x8x8xf32>
    %89 = arith.subf %85, %88 : vector<2x8x8xf32>
    %90 = math.exp %89 : vector<2x8x8xf32>
    %cst_39 = arith.constant dense<0.000000e+00> : vector<2x8xf32>
    %91 = vector.multi_reduction <add>, %90, %cst_39 [2] : vector<2x8x8xf32> to vector<2x8xf32>
    %92 = vector.shape_cast %91 : vector<2x8xf32> to vector<2x8x1xf32>
    %93 = vector.broadcast %92 : vector<2x8x1xf32> to vector<2x8x8xf32>
    %94 = arith.divf %90, %93 : vector<2x8x8xf32>
    %95 = arith.truncf %94 : vector<2x8x8xf32> to vector<2x8x8xbf16>
    "tpu.trace_start"() <{level = 10 : i32, message = "bqk,bkc->bqc"}> : () -> ()
    %cst_40 = arith.constant dense<0.000000e+00> : vector<2x8x32xf32>
    %96 = tpu.matmul %95, %82, %cst_40 {dimension_numbers = #tpu.dot_dimension_numbers<[2], [1], [1], [2], [0, 0, 0, 1, 1, 2], [0], [0]>} : vector<2x8x8xbf16>, vector<2x8x32xbf16>, vector<2x8x32xf32> -> vector<2x8x32xf32>
    "tpu.trace_stop"() : () -> ()
    %97 = vector.extract_strided_slice %4 {offsets = [3, 0, 0], sizes = [1, 1, 32], strides = [1, 1, 1]} : vector<4x1x32xf32> to vector<1x1x32xf32>
    %98 = vector.shape_cast %97 : vector<1x1x32xf32> to vector<1x32xf32>
    %99 = vector.broadcast %98 : vector<1x32xf32> to vector<16x32xf32>
    %100 = arith.mulf %12, %99 : vector<16x32xf32>
    %101 = vector.shape_cast %100 : vector<16x32xf32> to vector<2x8x32xf32>
    %102 = arith.truncf %101 : vector<2x8x32xf32> to vector<2x8x32xbf16>
    %103 = vector.broadcast %98 : vector<1x32xf32> to vector<16x32xf32>
    %104 = arith.mulf %22, %103 : vector<16x32xf32>
    %105 = vector.shape_cast %104 : vector<16x32xf32> to vector<2x8x32xf32>
    %106 = arith.truncf %105 : vector<2x8x32xf32> to vector<2x8x32xbf16>
    "tpu.trace_start"() <{level = 10 : i32, message = "bqc,bkc->bqk"}> : () -> ()
    %cst_41 = arith.constant dense<0.000000e+00> : vector<2x8x8xf32>
    %107 = tpu.matmul %102, %24, %cst_41 {dimension_numbers = #tpu.dot_dimension_numbers<[2], [2], [1], [1], [0, 0, 0, 1, 1, 1], [0], [0]>} : vector<2x8x32xbf16>, vector<2x8x32xbf16>, vector<2x8x8xf32> -> vector<2x8x8xf32>
    "tpu.trace_stop"() : () -> ()
    %cst_42 = arith.constant 0.353553385 : f32
    %108 = vector.broadcast %cst_42 : f32 to vector<2x8x8xf32>
    %109 = arith.mulf %107, %108 : vector<2x8x8xf32>
    %cst_43 = arith.constant dense<0xFF800000> : vector<2x8xf32>
    %110 = vector.multi_reduction <maximumf>, %109, %cst_43 [2] : vector<2x8x8xf32> to vector<2x8xf32>
    %111 = vector.shape_cast %110 : vector<2x8xf32> to vector<2x8x1xf32>
    %112 = vector.broadcast %111 : vector<2x8x1xf32> to vector<2x8x8xf32>
    %113 = arith.subf %109, %112 : vector<2x8x8xf32>
    %114 = math.exp %113 : vector<2x8x8xf32>
    %cst_44 = arith.constant dense<0.000000e+00> : vector<2x8xf32>
    %115 = vector.multi_reduction <add>, %114, %cst_44 [2] : vector<2x8x8xf32> to vector<2x8xf32>
    %116 = vector.shape_cast %115 : vector<2x8xf32> to vector<2x8x1xf32>
    %117 = vector.broadcast %116 : vector<2x8x1xf32> to vector<2x8x8xf32>
    %118 = arith.divf %114, %117 : vector<2x8x8xf32>
    %119 = arith.truncf %118 : vector<2x8x8xf32> to vector<2x8x8xbf16>
    "tpu.trace_start"() <{level = 10 : i32, message = "bqk,bkc->bqc"}> : () -> ()
    %cst_45 = arith.constant dense<0.000000e+00> : vector<2x8x32xf32>
    %120 = tpu.matmul %119, %106, %cst_45 {dimension_numbers = #tpu.dot_dimension_numbers<[2], [1], [1], [2], [0, 0, 0, 1, 1, 2], [0], [0]>} : vector<2x8x8xbf16>, vector<2x8x32xbf16>, vector<2x8x32xf32> -> vector<2x8x32xf32>
    "tpu.trace_stop"() : () -> ()
    %121 = arith.addf %48, %72 : vector<2x8x32xf32>
    %122 = arith.addf %96, %120 : vector<2x8x32xf32>
    %123 = arith.addf %121, %122 : vector<2x8x32xf32>
    %124 = vector.shape_cast %123 : vector<2x8x32xf32> to vector<16x32xf32>
    %125 = arith.truncf %124 : vector<16x32xf32> to vector<16x32xbf16>
    %c0_46 = arith.constant 0 : index
    %c0_47 = arith.constant 0 : index
    %126 = vector.load %arg10[%c0_46, %c0_47] : memref<32x32xbf16, #tpu.memory_space<vmem>>, vector<32x32xbf16>
    %cst_48 = arith.constant dense<0.000000e+00> : vector<16x32xf32>
    %127 = tpu.matmul %125, %126, %cst_48 {dimension_numbers = #tpu.dot_dimension_numbers<[1], [0], [0], [1], [0, 0, 1, 1], [], []>} : vector<16x32xbf16>, vector<32x32xbf16>, vector<16x32xf32> -> vector<16x32xf32>
    %c0_49 = arith.constant 0 : index
    %c0_50 = arith.constant 0 : index
    %128 = vector.load %arg11[%c0_49, %c0_50] : memref<1x32xf32, #tpu.memory_space<vmem>>, vector<1x32xf32>
    %129 = vector.broadcast %128 : vector<1x32xf32> to vector<16x32xf32>
    %130 = arith.addf %127, %129 : vector<16x32xf32>
    %131 = arith.addf %1, %130 : vector<16x32xf32>
    %cst_51 = arith.constant dense<0.000000e+00> : vector<16xf32>
    %132 = vector.multi_reduction <add>, %131, %cst_51 [1] : vector<16x32xf32> to vector<16xf32>
    %133 = vector.shape_cast %132 : vector<16xf32> to vector<16x1xf32>
    %cst_52 = arith.constant 3.200000e+01 : f32
    %134 = vector.broadcast %cst_52 : f32 to vector<16x1xf32>
    %135 = arith.divf %133, %134 : vector<16x1xf32>
    %136 = arith.mulf %131, %131 : vector<16x32xf32>
    %cst_53 = arith.constant dense<0.000000e+00> : vector<16xf32>
    %137 = vector.multi_reduction <add>, %136, %cst_53 [1] : vector<16x32xf32> to vector<16xf32>
    %138 = vector.shape_cast %137 : vector<16xf32> to vector<16x1xf32>
    %cst_54 = arith.constant 3.200000e+01 : f32
    %139 = vector.broadcast %cst_54 : f32 to vector<16x1xf32>
    %140 = arith.divf %138, %139 : vector<16x1xf32>
    %141 = arith.mulf %135, %135 : vector<16x1xf32>
    %142 = arith.subf %140, %141 : vector<16x1xf32>
    %143 = vector.broadcast %135 : vector<16x1xf32> to vector<16x32xf32>
    %144 = arith.subf %131, %143 : vector<16x32xf32>
    %cst_55 = arith.constant 9.99999974E-6 : f32
    %145 = vector.broadcast %cst_55 : f32 to vector<16x1xf32>
    %146 = arith.addf %142, %145 : vector<16x1xf32>
    %147 = math.rsqrt %146 : vector<16x1xf32>
    %148 = vector.broadcast %147 : vector<16x1xf32> to vector<16x32xf32>
    %149 = arith.mulf %144, %148 : vector<16x32xf32>
    %150 = vector.broadcast %5 : vector<1x32xf32> to vector<16x32xf32>
    %151 = arith.mulf %149, %150 : vector<16x32xf32>
    %152 = vector.broadcast %6 : vector<1x32xf32> to vector<16x32xf32>
    %153 = arith.addf %151, %152 : vector<16x32xf32>
    %154 = tpu.iota {dimensions = array<i32: 2>} : vector<2x1x16xi32>
    %155 = tpu.iota {dimensions = array<i32: 0>} : vector<2x1x16xi32>
    %c0_56 = arith.constant 0 : index
    %156 = memref.load %arg0[%c0_56] : memref<2xi32, #tpu.memory_space<smem>>
    %157 = vector.broadcast %156 : i32 to vector<2x1x16xi32>
    %c1_i32 = arith.constant 1 : i32
    %158 = vector.broadcast %c1_i32 : i32 to vector<2x1x16xi32>
    %159 = arith.cmpi eq, %155, %158 : vector<2x1x16xi32>
    %c1 = arith.constant 1 : index
    %160 = memref.load %arg0[%c1] : memref<2xi32, #tpu.memory_space<smem>>
    %161 = vector.broadcast %160 : i32 to vector<2x1x16xi32>
    %162 = arith.select %159, %161, %157 : vector<2x1x16xi1>, vector<2x1x16xi32>
    %163 = arith.cmpi slt, %154, %162 : vector<2x1x16xi32>
    %cst_57 = arith.constant 0.000000e+00 : f32
    %cst_58 = arith.constant -1.000000e+09 : f32
    %164 = vector.broadcast %cst_57 : f32 to vector<2x1x16xf32>
    %165 = vector.broadcast %cst_58 : f32 to vector<2x1x16xf32>
    %166 = arith.select %163, %164, %165 : vector<2x1x16xi1>, vector<2x1x16xf32>
    %167 = arith.truncf %153 : vector<16x32xf32> to vector<16x32xbf16>
    %168 = arith.truncf %3 : vector<32x32xf32> to vector<32x32xbf16>
    %c0_59 = arith.constant 0 : index
    %c0_60 = arith.constant 0 : index
    %169 = vector.load %arg12[%c0_59, %c0_60] : memref<32x32xbf16, #tpu.memory_space<vmem>>, vector<32x32xbf16>
    %cst_61 = arith.constant dense<0.000000e+00> : vector<16x32xf32>
    %170 = tpu.matmul %167, %169, %cst_61 {dimension_numbers = #tpu.dot_dimension_numbers<[1], [0], [0], [1], [0, 0, 1, 1], [], []>} : vector<16x32xbf16>, vector<32x32xbf16>, vector<16x32xf32> -> vector<16x32xf32>
    %c0_62 = arith.constant 0 : index
    %c0_63 = arith.constant 0 : index
    %171 = vector.load %arg13[%c0_62, %c0_63] : memref<1x32xf32, #tpu.memory_space<vmem>>, vector<1x32xf32>
    %172 = vector.broadcast %171 : vector<1x32xf32> to vector<16x32xf32>
    %173 = arith.addf %170, %172 : vector<16x32xf32>
    %c0_64 = arith.constant 0 : index
    %c0_65 = arith.constant 0 : index
    %174 = vector.load %arg14[%c0_64, %c0_65] : memref<32x32xbf16, #tpu.memory_space<vmem>>, vector<32x32xbf16>
    %cst_66 = arith.constant dense<0.000000e+00> : vector<32x32xf32>
    %175 = tpu.matmul %168, %174, %cst_66 {dimension_numbers = #tpu.dot_dimension_numbers<[1], [0], [0], [1], [0, 0, 1, 1], [], []>} : vector<32x32xbf16>, vector<32x32xbf16>, vector<32x32xf32> -> vector<32x32xf32>
    %c0_67 = arith.constant 0 : index
    %c0_68 = arith.constant 0 : index
    %176 = vector.load %arg15[%c0_67, %c0_68] : memref<1x32xf32, #tpu.memory_space<vmem>>, vector<1x32xf32>
    %177 = vector.broadcast %176 : vector<1x32xf32> to vector<32x32xf32>
    %178 = arith.addf %175, %177 : vector<32x32xf32>
    %c0_69 = arith.constant 0 : index
    %c0_70 = arith.constant 0 : index
    %179 = vector.load %arg16[%c0_69, %c0_70] : memref<32x32xbf16, #tpu.memory_space<vmem>>, vector<32x32xbf16>
    %cst_71 = arith.constant dense<0.000000e+00> : vector<32x32xf32>
    %180 = tpu.matmul %168, %179, %cst_71 {dimension_numbers = #tpu.dot_dimension_numbers<[1], [0], [0], [1], [0, 0, 1, 1], [], []>} : vector<32x32xbf16>, vector<32x32xbf16>, vector<32x32xf32> -> vector<32x32xf32>
    %c0_72 = arith.constant 0 : index
    %c0_73 = arith.constant 0 : index
    %181 = vector.load %arg17[%c0_72, %c0_73] : memref<1x32xf32, #tpu.memory_space<vmem>>, vector<1x32xf32>
    %182 = vector.broadcast %181 : vector<1x32xf32> to vector<32x32xf32>
    %183 = arith.addf %180, %182 : vector<32x32xf32>
    %184 = vector.shape_cast %178 : vector<32x32xf32> to vector<2x16x32xf32>
    %185 = arith.truncf %184 : vector<2x16x32xf32> to vector<2x16x32xbf16>
    %186 = vector.extract_strided_slice %4 {offsets = [0, 0, 0], sizes = [1, 1, 32], strides = [1, 1, 1]} : vector<4x1x32xf32> to vector<1x1x32xf32>
    %187 = vector.shape_cast %186 : vector<1x1x32xf32> to vector<1x32xf32>
    %188 = vector.broadcast %187 : vector<1x32xf32> to vector<16x32xf32>
    %189 = arith.mulf %173, %188 : vector<16x32xf32>
    %190 = vector.shape_cast %189 : vector<16x32xf32> to vector<2x8x32xf32>
    %191 = arith.truncf %190 : vector<2x8x32xf32> to vector<2x8x32xbf16>
    %192 = vector.broadcast %187 : vector<1x32xf32> to vector<32x32xf32>
    %193 = arith.mulf %183, %192 : vector<32x32xf32>
    %194 = vector.shape_cast %193 : vector<32x32xf32> to vector<2x16x32xf32>
    %195 = arith.truncf %194 : vector<2x16x32xf32> to vector<2x16x32xbf16>
    "tpu.trace_start"() <{level = 10 : i32, message = "bqc,bkc->bqk"}> : () -> ()
    %cst_74 = arith.constant dense<0.000000e+00> : vector<2x8x16xf32>
    %196 = tpu.matmul %191, %185, %cst_74 {dimension_numbers = #tpu.dot_dimension_numbers<[2], [2], [1], [1], [0, 0, 0, 1, 1, 1], [0], [0]>} : vector<2x8x32xbf16>, vector<2x16x32xbf16>, vector<2x8x16xf32> -> vector<2x8x16xf32>
    "tpu.trace_stop"() : () -> ()
    %cst_75 = arith.constant 0.353553385 : f32
    %197 = vector.broadcast %cst_75 : f32 to vector<2x8x16xf32>
    %198 = arith.mulf %196, %197 : vector<2x8x16xf32>
    %199 = vector.broadcast %166 : vector<2x1x16xf32> to vector<2x8x16xf32>
    %200 = arith.addf %198, %199 : vector<2x8x16xf32>
    %cst_76 = arith.constant dense<0xFF800000> : vector<2x8xf32>
    %201 = vector.multi_reduction <maximumf>, %200, %cst_76 [2] : vector<2x8x16xf32> to vector<2x8xf32>
    %202 = vector.shape_cast %201 : vector<2x8xf32> to vector<2x8x1xf32>
    %203 = vector.broadcast %202 : vector<2x8x1xf32> to vector<2x8x16xf32>
    %204 = arith.subf %200, %203 : vector<2x8x16xf32>
    %205 = math.exp %204 : vector<2x8x16xf32>
    %cst_77 = arith.constant dense<0.000000e+00> : vector<2x8xf32>
    %206 = vector.multi_reduction <add>, %205, %cst_77 [2] : vector<2x8x16xf32> to vector<2x8xf32>
    %207 = vector.shape_cast %206 : vector<2x8xf32> to vector<2x8x1xf32>
    %208 = vector.broadcast %207 : vector<2x8x1xf32> to vector<2x8x16xf32>
    %209 = arith.divf %205, %208 : vector<2x8x16xf32>
    %210 = arith.truncf %209 : vector<2x8x16xf32> to vector<2x8x16xbf16>
    "tpu.trace_start"() <{level = 10 : i32, message = "bqk,bkc->bqc"}> : () -> ()
    %cst_78 = arith.constant dense<0.000000e+00> : vector<2x8x32xf32>
    %211 = tpu.matmul %210, %195, %cst_78 {dimension_numbers = #tpu.dot_dimension_numbers<[2], [1], [1], [2], [0, 0, 0, 1, 1, 2], [0], [0]>} : vector<2x8x16xbf16>, vector<2x16x32xbf16>, vector<2x8x32xf32> -> vector<2x8x32xf32>
    "tpu.trace_stop"() : () -> ()
    %212 = vector.extract_strided_slice %4 {offsets = [1, 0, 0], sizes = [1, 1, 32], strides = [1, 1, 1]} : vector<4x1x32xf32> to vector<1x1x32xf32>
    %213 = vector.shape_cast %212 : vector<1x1x32xf32> to vector<1x32xf32>
    %214 = vector.broadcast %213 : vector<1x32xf32> to vector<16x32xf32>
    %215 = arith.mulf %173, %214 : vector<16x32xf32>
    %216 = vector.shape_cast %215 : vector<16x32xf32> to vector<2x8x32xf32>
    %217 = arith.truncf %216 : vector<2x8x32xf32> to vector<2x8x32xbf16>
    %218 = vector.broadcast %213 : vector<1x32xf32> to vector<32x32xf32>
    %219 = arith.mulf %183, %218 : vector<32x32xf32>
    %220 = vector.shape_cast %219 : vector<32x32xf32> to vector<2x16x32xf32>
    %221 = arith.truncf %220 : vector<2x16x32xf32> to vector<2x16x32xbf16>
    "tpu.trace_start"() <{level = 10 : i32, message = "bqc,bkc->bqk"}> : () -> ()
    %cst_79 = arith.constant dense<0.000000e+00> : vector<2x8x16xf32>
    %222 = tpu.matmul %217, %185, %cst_79 {dimension_numbers = #tpu.dot_dimension_numbers<[2], [2], [1], [1], [0, 0, 0, 1, 1, 1], [0], [0]>} : vector<2x8x32xbf16>, vector<2x16x32xbf16>, vector<2x8x16xf32> -> vector<2x8x16xf32>
    "tpu.trace_stop"() : () -> ()
    %cst_80 = arith.constant 0.353553385 : f32
    %223 = vector.broadcast %cst_80 : f32 to vector<2x8x16xf32>
    %224 = arith.mulf %222, %223 : vector<2x8x16xf32>
    %225 = vector.broadcast %166 : vector<2x1x16xf32> to vector<2x8x16xf32>
    %226 = arith.addf %224, %225 : vector<2x8x16xf32>
    %cst_81 = arith.constant dense<0xFF800000> : vector<2x8xf32>
    %227 = vector.multi_reduction <maximumf>, %226, %cst_81 [2] : vector<2x8x16xf32> to vector<2x8xf32>
    %228 = vector.shape_cast %227 : vector<2x8xf32> to vector<2x8x1xf32>
    %229 = vector.broadcast %228 : vector<2x8x1xf32> to vector<2x8x16xf32>
    %230 = arith.subf %226, %229 : vector<2x8x16xf32>
    %231 = math.exp %230 : vector<2x8x16xf32>
    %cst_82 = arith.constant dense<0.000000e+00> : vector<2x8xf32>
    %232 = vector.multi_reduction <add>, %231, %cst_82 [2] : vector<2x8x16xf32> to vector<2x8xf32>
    %233 = vector.shape_cast %232 : vector<2x8xf32> to vector<2x8x1xf32>
    %234 = vector.broadcast %233 : vector<2x8x1xf32> to vector<2x8x16xf32>
    %235 = arith.divf %231, %234 : vector<2x8x16xf32>
    %236 = arith.truncf %235 : vector<2x8x16xf32> to vector<2x8x16xbf16>
    "tpu.trace_start"() <{level = 10 : i32, message = "bqk,bkc->bqc"}> : () -> ()
    %cst_83 = arith.constant dense<0.000000e+00> : vector<2x8x32xf32>
    %237 = tpu.matmul %236, %221, %cst_83 {dimension_numbers = #tpu.dot_dimension_numbers<[2], [1], [1], [2], [0, 0, 0, 1, 1, 2], [0], [0]>} : vector<2x8x16xbf16>, vector<2x16x32xbf16>, vector<2x8x32xf32> -> vector<2x8x32xf32>
    "tpu.trace_stop"() : () -> ()
    %238 = vector.extract_strided_slice %4 {offsets = [2, 0, 0], sizes = [1, 1, 32], strides = [1, 1, 1]} : vector<4x1x32xf32> to vector<1x1x32xf32>
    %239 = vector.shape_cast %238 : vector<1x1x32xf32> to vector<1x32xf32>
    %240 = vector.broadcast %239 : vector<1x32xf32> to vector<16x32xf32>
    %241 = arith.mulf %173, %240 : vector<16x32xf32>
    %242 = vector.shape_cast %241 : vector<16x32xf32> to vector<2x8x32xf32>
    %243 = arith.truncf %242 : vector<2x8x32xf32> to vector<2x8x32xbf16>
    %244 = vector.broadcast %239 : vector<1x32xf32> to vector<32x32xf32>
    %245 = arith.mulf %183, %244 : vector<32x32xf32>
    %246 = vector.shape_cast %245 : vector<32x32xf32> to vector<2x16x32xf32>
    %247 = arith.truncf %246 : vector<2x16x32xf32> to vector<2x16x32xbf16>
    "tpu.trace_start"() <{level = 10 : i32, message = "bqc,bkc->bqk"}> : () -> ()
    %cst_84 = arith.constant dense<0.000000e+00> : vector<2x8x16xf32>
    %248 = tpu.matmul %243, %185, %cst_84 {dimension_numbers = #tpu.dot_dimension_numbers<[2], [2], [1], [1], [0, 0, 0, 1, 1, 1], [0], [0]>} : vector<2x8x32xbf16>, vector<2x16x32xbf16>, vector<2x8x16xf32> -> vector<2x8x16xf32>
    "tpu.trace_stop"() : () -> ()
    %cst_85 = arith.constant 0.353553385 : f32
    %249 = vector.broadcast %cst_85 : f32 to vector<2x8x16xf32>
    %250 = arith.mulf %248, %249 : vector<2x8x16xf32>
    %251 = vector.broadcast %166 : vector<2x1x16xf32> to vector<2x8x16xf32>
    %252 = arith.addf %250, %251 : vector<2x8x16xf32>
    %cst_86 = arith.constant dense<0xFF800000> : vector<2x8xf32>
    %253 = vector.multi_reduction <maximumf>, %252, %cst_86 [2] : vector<2x8x16xf32> to vector<2x8xf32>
    %254 = vector.shape_cast %253 : vector<2x8xf32> to vector<2x8x1xf32>
    %255 = vector.broadcast %254 : vector<2x8x1xf32> to vector<2x8x16xf32>
    %256 = arith.subf %252, %255 : vector<2x8x16xf32>
    %257 = math.exp %256 : vector<2x8x16xf32>
    %cst_87 = arith.constant dense<0.000000e+00> : vector<2x8xf32>
    %258 = vector.multi_reduction <add>, %257, %cst_87 [2] : vector<2x8x16xf32> to vector<2x8xf32>
    %259 = vector.shape_cast %258 : vector<2x8xf32> to vector<2x8x1xf32>
    %260 = vector.broadcast %259 : vector<2x8x1xf32> to vector<2x8x16xf32>
    %261 = arith.divf %257, %260 : vector<2x8x16xf32>
    %262 = arith.truncf %261 : vector<2x8x16xf32> to vector<2x8x16xbf16>
    "tpu.trace_start"() <{level = 10 : i32, message = "bqk,bkc->bqc"}> : () -> ()
    %cst_88 = arith.constant dense<0.000000e+00> : vector<2x8x32xf32>
    %263 = tpu.matmul %262, %247, %cst_88 {dimension_numbers = #tpu.dot_dimension_numbers<[2], [1], [1], [2], [0, 0, 0, 1, 1, 2], [0], [0]>} : vector<2x8x16xbf16>, vector<2x16x32xbf16>, vector<2x8x32xf32> -> vector<2x8x32xf32>
    "tpu.trace_stop"() : () -> ()
    %264 = vector.extract_strided_slice %4 {offsets = [3, 0, 0], sizes = [1, 1, 32], strides = [1, 1, 1]} : vector<4x1x32xf32> to vector<1x1x32xf32>
    %265 = vector.shape_cast %264 : vector<1x1x32xf32> to vector<1x32xf32>
    %266 = vector.broadcast %265 : vector<1x32xf32> to vector<16x32xf32>
    %267 = arith.mulf %173, %266 : vector<16x32xf32>
    %268 = vector.shape_cast %267 : vector<16x32xf32> to vector<2x8x32xf32>
    %269 = arith.truncf %268 : vector<2x8x32xf32> to vector<2x8x32xbf16>
    %270 = vector.broadcast %265 : vector<1x32xf32> to vector<32x32xf32>
    %271 = arith.mulf %183, %270 : vector<32x32xf32>
    %272 = vector.shape_cast %271 : vector<32x32xf32> to vector<2x16x32xf32>
    %273 = arith.truncf %272 : vector<2x16x32xf32> to vector<2x16x32xbf16>
    "tpu.trace_start"() <{level = 10 : i32, message = "bqc,bkc->bqk"}> : () -> ()
    %cst_89 = arith.constant dense<0.000000e+00> : vector<2x8x16xf32>
    %274 = tpu.matmul %269, %185, %cst_89 {dimension_numbers = #tpu.dot_dimension_numbers<[2], [2], [1], [1], [0, 0, 0, 1, 1, 1], [0], [0]>} : vector<2x8x32xbf16>, vector<2x16x32xbf16>, vector<2x8x16xf32> -> vector<2x8x16xf32>
    "tpu.trace_stop"() : () -> ()
    %cst_90 = arith.constant 0.353553385 : f32
    %275 = vector.broadcast %cst_90 : f32 to vector<2x8x16xf32>
    %276 = arith.mulf %274, %275 : vector<2x8x16xf32>
    %277 = vector.broadcast %166 : vector<2x1x16xf32> to vector<2x8x16xf32>
    %278 = arith.addf %276, %277 : vector<2x8x16xf32>
    %cst_91 = arith.constant dense<0xFF800000> : vector<2x8xf32>
    %279 = vector.multi_reduction <maximumf>, %278, %cst_91 [2] : vector<2x8x16xf32> to vector<2x8xf32>
    %280 = vector.shape_cast %279 : vector<2x8xf32> to vector<2x8x1xf32>
    %281 = vector.broadcast %280 : vector<2x8x1xf32> to vector<2x8x16xf32>
    %282 = arith.subf %278, %281 : vector<2x8x16xf32>
    %283 = math.exp %282 : vector<2x8x16xf32>
    %cst_92 = arith.constant dense<0.000000e+00> : vector<2x8xf32>
    %284 = vector.multi_reduction <add>, %283, %cst_92 [2] : vector<2x8x16xf32> to vector<2x8xf32>
    %285 = vector.shape_cast %284 : vector<2x8xf32> to vector<2x8x1xf32>
    %286 = vector.broadcast %285 : vector<2x8x1xf32> to vector<2x8x16xf32>
    %287 = arith.divf %283, %286 : vector<2x8x16xf32>
    %288 = arith.truncf %287 : vector<2x8x16xf32> to vector<2x8x16xbf16>
    "tpu.trace_start"() <{level = 10 : i32, message = "bqk,bkc->bqc"}> : () -> ()
    %cst_93 = arith.constant dense<0.000000e+00> : vector<2x8x32xf32>
    %289 = tpu.matmul %288, %273, %cst_93 {dimension_numbers = #tpu.dot_dimension_numbers<[2], [1], [1], [2], [0, 0, 0, 1, 1, 2], [0], [0]>} : vector<2x8x16xbf16>, vector<2x16x32xbf16>, vector<2x8x32xf32> -> vector<2x8x32xf32>
    "tpu.trace_stop"() : () -> ()
    %290 = arith.addf %211, %237 : vector<2x8x32xf32>
    %291 = arith.addf %263, %289 : vector<2x8x32xf32>
    %292 = arith.addf %290, %291 : vector<2x8x32xf32>
    %293 = vector.shape_cast %292 : vector<2x8x32xf32> to vector<16x32xf32>
    %294 = arith.truncf %293 : vector<16x32xf32> to vector<16x32xbf16>
    %c0_94 = arith.constant 0 : index
    %c0_95 = arith.constant 0 : index
    %295 = vector.load %arg18[%c0_94, %c0_95] : memref<32x32xbf16, #tpu.memory_space<vmem>>, vector<32x32xbf16>
    %cst_96 = arith.constant dense<0.000000e+00> : vector<16x32xf32>
    %296 = tpu.matmul %294, %295, %cst_96 {dimension_numbers = #tpu.dot_dimension_numbers<[1], [0], [0], [1], [0, 0, 1, 1], [], []>} : vector<16x32xbf16>, vector<32x32xbf16>, vector<16x32xf32> -> vector<16x32xf32>
    %c0_97 = arith.constant 0 : index
    %c0_98 = arith.constant 0 : index
    %297 = vector.load %arg19[%c0_97, %c0_98] : memref<1x32xf32, #tpu.memory_space<vmem>>, vector<1x32xf32>
    %298 = vector.broadcast %297 : vector<1x32xf32> to vector<16x32xf32>
    %299 = arith.addf %296, %298 : vector<16x32xf32>
    %300 = arith.addf %153, %299 : vector<16x32xf32>
    %cst_99 = arith.constant dense<0.000000e+00> : vector<16xf32>
    %301 = vector.multi_reduction <add>, %300, %cst_99 [1] : vector<16x32xf32> to vector<16xf32>
    %302 = vector.shape_cast %301 : vector<16xf32> to vector<16x1xf32>
    %cst_100 = arith.constant 3.200000e+01 : f32
    %303 = vector.broadcast %cst_100 : f32 to vector<16x1xf32>
    %304 = arith.divf %302, %303 : vector<16x1xf32>
    %305 = arith.mulf %300, %300 : vector<16x32xf32>
    %cst_101 = arith.constant dense<0.000000e+00> : vector<16xf32>
    %306 = vector.multi_reduction <add>, %305, %cst_101 [1] : vector<16x32xf32> to vector<16xf32>
    %307 = vector.shape_cast %306 : vector<16xf32> to vector<16x1xf32>
    %cst_102 = arith.constant 3.200000e+01 : f32
    %308 = vector.broadcast %cst_102 : f32 to vector<16x1xf32>
    %309 = arith.divf %307, %308 : vector<16x1xf32>
    %310 = arith.mulf %304, %304 : vector<16x1xf32>
    %311 = arith.subf %309, %310 : vector<16x1xf32>
    %312 = vector.broadcast %304 : vector<16x1xf32> to vector<16x32xf32>
    %313 = arith.subf %300, %312 : vector<16x32xf32>
    %cst_103 = arith.constant 9.99999974E-6 : f32
    %314 = vector.broadcast %cst_103 : f32 to vector<16x1xf32>
    %315 = arith.addf %311, %314 : vector<16x1xf32>
    %316 = math.rsqrt %315 : vector<16x1xf32>
    %317 = vector.broadcast %316 : vector<16x1xf32> to vector<16x32xf32>
    %318 = arith.mulf %313, %317 : vector<16x32xf32>
    %319 = vector.broadcast %5 : vector<1x32xf32> to vector<16x32xf32>
    %320 = arith.mulf %318, %319 : vector<16x32xf32>
    %321 = vector.broadcast %6 : vector<1x32xf32> to vector<16x32xf32>
    %322 = arith.addf %320, %321 : vector<16x32xf32>
    %323 = arith.truncf %322 : vector<16x32xf32> to vector<16x32xbf16>
    %c0_104 = arith.constant 0 : index
    %c0_105 = arith.constant 0 : index
    %324 = vector.load %arg22[%c0_104, %c0_105] : memref<32x128xbf16, #tpu.memory_space<vmem>>, vector<32x128xbf16>
    %cst_106 = arith.constant dense<0.000000e+00> : vector<16x128xf32>
    %325 = tpu.matmul %323, %324, %cst_106 {dimension_numbers = #tpu.dot_dimension_numbers<[1], [0], [0], [1], [0, 0, 1, 1], [], []>} : vector<16x32xbf16>, vector<32x128xbf16>, vector<16x128xf32> -> vector<16x128xf32>
    %c0_107 = arith.constant 0 : index
    %c0_108 = arith.constant 0 : index
    %326 = vector.load %arg23[%c0_107, %c0_108] : memref<1x128xf32, #tpu.memory_space<vmem>>, vector<1x128xf32>
    %327 = vector.broadcast %326 : vector<1x128xf32> to vector<16x128xf32>
    %328 = arith.addf %325, %327 : vector<16x128xf32>
    %cst_109 = arith.constant 0.000000e+00 : f32
    %329 = vector.broadcast %cst_109 : f32 to vector<16x128xf32>
    %330 = arith.maximumf %328, %329 : vector<16x128xf32>
    %331 = arith.truncf %330 : vector<16x128xf32> to vector<16x128xbf16>
    %c0_110 = arith.constant 0 : index
    %c0_111 = arith.constant 0 : index
    %332 = vector.load %arg24[%c0_110, %c0_111] : memref<128x32xbf16, #tpu.memory_space<vmem>>, vector<128x32xbf16>
    %cst_112 = arith.constant dense<0.000000e+00> : vector<16x32xf32>
    %333 = tpu.matmul %331, %332, %cst_112 {dimension_numbers = #tpu.dot_dimension_numbers<[1], [0], [0], [1], [0, 0, 1, 1], [], []>} : vector<16x128xbf16>, vector<128x32xbf16>, vector<16x32xf32> -> vector<16x32xf32>
    %c0_113 = arith.constant 0 : index
    %c0_114 = arith.constant 0 : index
    %334 = vector.load %arg25[%c0_113, %c0_114] : memref<1x32xf32, #tpu.memory_space<vmem>>, vector<1x32xf32>
    %335 = vector.broadcast %334 : vector<1x32xf32> to vector<16x32xf32>
    %336 = arith.addf %333, %335 : vector<16x32xf32>
    %337 = arith.addf %322, %336 : vector<16x32xf32>
    %cst_115 = arith.constant dense<0.000000e+00> : vector<16xf32>
    %338 = vector.multi_reduction <add>, %337, %cst_115 [1] : vector<16x32xf32> to vector<16xf32>
    %339 = vector.shape_cast %338 : vector<16xf32> to vector<16x1xf32>
    %cst_116 = arith.constant 3.200000e+01 : f32
    %340 = vector.broadcast %cst_116 : f32 to vector<16x1xf32>
    %341 = arith.divf %339, %340 : vector<16x1xf32>
    %342 = arith.mulf %337, %337 : vector<16x32xf32>
    %cst_117 = arith.constant dense<0.000000e+00> : vector<16xf32>
    %343 = vector.multi_reduction <add>, %342, %cst_117 [1] : vector<16x32xf32> to vector<16xf32>
    %344 = vector.shape_cast %343 : vector<16xf32> to vector<16x1xf32>
    %cst_118 = arith.constant 3.200000e+01 : f32
    %345 = vector.broadcast %cst_118 : f32 to vector<16x1xf32>
    %346 = arith.divf %344, %345 : vector<16x1xf32>
    %347 = arith.mulf %341, %341 : vector<16x1xf32>
    %348 = arith.subf %346, %347 : vector<16x1xf32>
    %349 = vector.broadcast %341 : vector<16x1xf32> to vector<16x32xf32>
    %350 = arith.subf %337, %349 : vector<16x32xf32>
    %cst_119 = arith.constant 9.99999974E-6 : f32
    %351 = vector.broadcast %cst_119 : f32 to vector<16x1xf32>
    %352 = arith.addf %348, %351 : vector<16x1xf32>
    %353 = math.rsqrt %352 : vector<16x1xf32>
    %354 = vector.broadcast %353 : vector<16x1xf32> to vector<16x32xf32>
    %355 = arith.mulf %350, %354 : vector<16x32xf32>
    %356 = vector.broadcast %5 : vector<1x32xf32> to vector<16x32xf32>
    %357 = arith.mulf %355, %356 : vector<16x32xf32>
    %358 = vector.broadcast %6 : vector<1x32xf32> to vector<16x32xf32>
    %359 = arith.addf %357, %358 : vector<16x32xf32>
    %360 = vector.shape_cast %359 : vector<16x32xf32> to vector<2x8x32xf32>
    %c0_120 = arith.constant 0 : index
    %c0_121 = arith.constant 0 : index
    %c0_122 = arith.constant 0 : index
    %361 = vector.load %arg26[%c0_120, %c0_121, %c0_122] : memref<2x8x32xf32, #tpu.memory_space<vmem>>, vector<2x8x32xf32>
    tpu.vector_store %arg26[%c0_120, %c0_121, %c0_122], %360 {strides = array<i32>} : memref<2x8x32xf32, #tpu.memory_space<vmem>>, vector<2x8x32xf32>,
    return
  }
}

</mosaic_0001>

<llo_original>
// kernel: tpu_custom_call.1
$region0: #{tpu_custom_call.1}
  #allocation0 [shape = 'u32[]', space=smem, size = 0x4, offset = 0x4, fixed_abs, tag = 'smem constant byte address 0x4 - core index']
  #allocation1 [shape = 'u32[72,128]{1,0:T(1,128)}', space=vmem, size = 0x9000, scoped, tag = 'internal scratch']
  %s0 = inlined_call_operand.hbm [shape: s32[2], index: 0, kind: input, shape index: {}]
  %s1 = inlined_call_operand.vmem [shape: f32[2,8,32], index: 1, kind: input, shape index: {}]
  %s2 = inlined_call_operand.vmem [shape: f32[2,16,32], index: 2, kind: input, shape index: {}]
  %s3 = inlined_call_operand.hbm [shape: f32[4,1,32], index: 3, kind: input, shape index: {}]
  %s4 = inlined_call_operand.vmem [shape: bf16[32,32], index: 4, kind: input, shape index: {}]
  %s5 = inlined_call_operand.vmem [shape: f32[1,32], index: 5, kind: input, shape index: {}]
  %s6 = inlined_call_operand.vmem [shape: bf16[32,32], index: 6, kind: input, shape index: {}]
  %s7 = inlined_call_operand.vmem [shape: f32[1,32], index: 7, kind: input, shape index: {}]
  %s8 = inlined_call_operand.hbm [shape: bf16[32,32], index: 8, kind: input, shape index: {}]
  %s9 = inlined_call_operand.vmem [shape: f32[1,32], index: 9, kind: input, shape index: {}]
  %s10 = inlined_call_operand.hbm [shape: bf16[32,32], index: 10, kind: input, shape index: {}]
  %s11 = inlined_call_operand.vmem [shape: f32[1,32], index: 11, kind: input, shape index: {}]
  %s12 = inlined_call_operand.hbm [shape: bf16[32,32], index: 12, kind: input, shape index: {}]
  %s13 = inlined_call_operand.vmem [shape: f32[1,32], index: 13, kind: input, shape index: {}]
  %s14 = inlined_call_operand.hbm [shape: bf16[32,32], index: 14, kind: input, shape index: {}]
  %s15 = inlined_call_operand.vmem [shape: f32[1,32], index: 15, kind: input, shape index: {}]
  %s16 = inlined_call_operand.hbm [shape: bf16[32,32], index: 16, kind: input, shape index: {}]
  %s17 = inlined_call_operand.vmem [shape: f32[1,32], index: 17, kind: input, shape index: {}]
  %s18 = inlined_call_operand.hbm [shape: bf16[32,32], index: 18, kind: input, shape index: {}]
  %s19 = inlined_call_operand.hbm [shape: f32[1,32], index: 19, kind: input, shape index: {}]
  %s20 = inlined_call_operand.hbm [shape: f32[1,32], index: 20, kind: input, shape index: {}]
  %s21 = inlined_call_operand.hbm [shape: f32[1,32], index: 21, kind: input, shape index: {}]
  %s22 = inlined_call_operand.hbm [shape: bf16[32,128], index: 22, kind: input, shape index: {}]
  %s23 = inlined_call_operand.hbm [shape: f32[1,128], index: 23, kind: input, shape index: {}]
  %s24 = inlined_call_operand.vmem [shape: bf16[128,32], index: 24, kind: input, shape index: {}]
  %s25 = inlined_call_operand.hbm [shape: f32[1,32], index: 25, kind: input, shape index: {}]
  %s26 = inlined_call_operand.hbm [shape: f32[2,8,32], index: 26, kind: output, shape index: {}]
  %s27 = sld [smem:[#allocation0]]
  $region170: #{tpu_custom_call.1} parent=0
    _
  %s29 = ssub.s32 1, %s27
  %s30 = scalar_select 0, %s29, %s27
  $region1: #{tpu_custom_call.1} parent=0
    #allocation2 [shape = 'u8[512]{0}', space=smem, size = 0x200, scoped, tag = 'input window, operand 0, single buffered']
    #allocation3 [shape = 's32[1]{0}', space=sflag, size = 0x4, scoped, tag = 'scoped memory for tpu_custom_call.1']
    #allocation4 [shape = 's32[1]{0}', space=sflag, size = 0x4, scoped, tag = 'scoped memory for tpu_custom_call.1']
    #allocation5 [shape = 's32[1]{0}', space=sflag, size = 0x4, scoped, tag = 'scoped memory for tpu_custom_call.1']
    #allocation6 [shape = 'u8[2048]{0}', space=vmem, size = 0x800, scoped, tag = 'input window, operand 3, single buffered']
    #allocation7 [shape = 'u8[8192]{0}', space=vmem, size = 0x2000, scoped, tag = 'input window, operand 8, single buffered']
    #allocation8 [shape = 's32[1]{0}', space=sflag, size = 0x4, scoped, tag = 'scoped memory for tpu_custom_call.1']
    #allocation9 [shape = 'u8[8192]{0}', space=vmem, size = 0x2000, scoped, tag = 'input window, operand 10, single buffered']
    #allocation10 [shape = 'u8[8192]{0}', space=vmem, size = 0x2000, scoped, tag = 'input window, operand 12, single buffered']
    #allocation11 [shape = 's32[1]{0}', space=sflag, size = 0x4, scoped, tag = 'scoped memory for tpu_custom_call.1']
    #allocation12 [shape = 'u8[8192]{0}', space=vmem, size = 0x2000, scoped, tag = 'input window, operand 14, single buffered']
    #allocation13 [shape = 'u8[8192]{0}', space=vmem, size = 0x2000, scoped, tag = 'input window, operand 16, single buffered']
    #allocation14 [shape = 's32[1]{0}', space=sflag, size = 0x4, scoped, tag = 'scoped memory for tpu_custom_call.1']
    #allocation15 [shape = 'u8[8192]{0}', space=vmem, size = 0x2000, scoped, tag = 'input window, operand 18, single buffered']
    #allocation16 [shape = 'u8[512]{0}', space=vmem, size = 0x400, scoped, tag = 'input window, operand 19, single buffered']
    #allocation17 [shape = 's32[1]{0}', space=sflag, size = 0x4, scoped, tag = 'scoped memory for tpu_custom_call.1']
    #allocation18 [shape = 'u8[512]{0}', space=vmem, size = 0x400, scoped, tag = 'input window, operand 20, single buffered']
    #allocation19 [shape = 'u8[512]{0}', space=vmem, size = 0x400, scoped, tag = 'input window, operand 21, single buffered']
    #allocation20 [shape = 's32[1]{0}', space=sflag, size = 0x4, scoped, tag = 'scoped memory for tpu_custom_call.1']
    #allocation21 [shape = 'u8[8192]{0}', space=vmem, size = 0x2000, scoped, tag = 'input window, operand 22, single buffered']
    #allocation22 [shape = 'u8[512]{0}', space=vmem, size = 0x400, scoped, tag = 'input window, operand 23, single buffered']
    #allocation23 [shape = 's32[1]{0}', space=sflag, size = 0x4, scoped, tag = 'scoped memory for tpu_custom_call.1']
    #allocation24 [shape = 'u8[512]{0}', space=vmem, size = 0x400, scoped, tag = 'input window, operand 25, single buffered']
    #allocation25 [shape = 'u8[8192]{0}', space=vmem, size = 0x2000, scoped, tag = 'output window, operand 0, single buffered']
    %31 = vsyncpa [#allocation5], 0
    %32 = vsyncpa [#allocation3], 0
    %33 = vsyncpa [#allocation8], 0
    %34 = vsyncpa [#allocation11], 0
    %35 = vsyncpa [#allocation14], 0
    %36 = vsyncpa [#allocation17], 0
    %37 = vsyncpa [#allocation20], 0
    %38 = vsyncpa [#allocation23], 0
    %39 = vsyncpa [#allocation4], 0
    // Predicated region
    $region2: #{tpu_custom_call.1} parent=1 // pred_check
      _
    $region3: #{tpu_custom_call.1} parent=1 // pred_check_branch
      %41 = sbr.rel (0) target = $region5
    $region4: #{tpu_custom_call.1} parent=1 // pred_region
      %43 = vsyncadd [#allocation5], 0
      %s45 = sshll.u32 %s0, 4
      %s46 = int_to_ptr.hbm [resolvable:$true] %s45
      %48 = dma.hbm_to_smem %s46, 16, [#allocation2], [#allocation5]
    $region5: #{tpu_custom_call.1} parent=1 // pred_fallthru
      _
    // Predicated region
    $region6: #{tpu_custom_call.1} parent=1 // pred_check
      _
    $region7: #{tpu_custom_call.1} parent=1 // pred_check_branch
      %50 = sbr.rel (0) target = $region9
    $region8: #{tpu_custom_call.1} parent=1 // pred_region
      _
    $region9: #{tpu_custom_call.1} parent=1 // pred_fallthru
      _
    // Predicated region
    $region10: #{tpu_custom_call.1} parent=1 // pred_check
      _
    $region11: #{tpu_custom_call.1} parent=1 // pred_check_branch
      %52 = sbr.rel (0) target = $region13
    $region12: #{tpu_custom_call.1} parent=1 // pred_region
      _
    $region13: #{tpu_custom_call.1} parent=1 // pred_fallthru
      _
    // Predicated region
    $region14: #{tpu_custom_call.1} parent=1 // pred_check
      _
    $region15: #{tpu_custom_call.1} parent=1 // pred_check_branch
      %54 = sbr.rel (0) target = $region17
    $region16: #{tpu_custom_call.1} parent=1 // pred_region
      %56 = vsyncadd [#allocation3], 0
      %s57 = sshll.u32 %s3, 4
      %s58 = int_to_ptr.hbm [resolvable:$true] %s57
      %s59 = sshll.u32 [#allocation6], 4
      %s60 = int_to_ptr.vmem [resolvable:$true] %s59
      %65 = dma.hbm_to_vmem [thread:$0]  %s58, 64, %s60, [#allocation3], 16, 16, 1
    $region17: #{tpu_custom_call.1} parent=1 // pred_fallthru
      _
    // Predicated region
    $region18: #{tpu_custom_call.1} parent=1 // pred_check
      _
    $region19: #{tpu_custom_call.1} parent=1 // pred_check_branch
      %67 = sbr.rel (0) target = $region21
    $region20: #{tpu_custom_call.1} parent=1 // pred_region
      _
    $region21: #{tpu_custom_call.1} parent=1 // pred_fallthru
      _
    // Predicated region
    $region22: #{tpu_custom_call.1} parent=1 // pred_check
      _
    $region23: #{tpu_custom_call.1} parent=1 // pred_check_branch
      %69 = sbr.rel (0) target = $region25
    $region24: #{tpu_custom_call.1} parent=1 // pred_region
      _
    $region25: #{tpu_custom_call.1} parent=1 // pred_fallthru
      _
    // Predicated region
    $region26: #{tpu_custom_call.1} parent=1 // pred_check
      _
    $region27: #{tpu_custom_call.1} parent=1 // pred_check_branch
      %71 = sbr.rel (0) target = $region29
    $region28: #{tpu_custom_call.1} parent=1 // pred_region
      _
    $region29: #{tpu_custom_call.1} parent=1 // pred_fallthru
      _
    // Predicated region
    $region30: #{tpu_custom_call.1} parent=1 // pred_check
      _
    $region31: #{tpu_custom_call.1} parent=1 // pred_check_branch
      %73 = sbr.rel (0) target = $region33
    $region32: #{tpu_custom_call.1} parent=1 // pred_region
      _
    $region33: #{tpu_custom_call.1} parent=1 // pred_fallthru
      _
    // Predicated region
    $region34: #{tpu_custom_call.1} parent=1 // pred_check
      _
    $region35: #{tpu_custom_call.1} parent=1 // pred_check_branch
      %75 = sbr.rel (0) target = $region37
    $region36: #{tpu_custom_call.1} parent=1 // pred_region
      %77 = vsyncadd [#allocation8], 0
      %s78 = sshll.u32 %s8, 4
      %s79 = int_to_ptr.hbm [resolvable:$true] %s78
      %s80 = sshll.u32 [#allocation7], 4
      %s81 = int_to_ptr.vmem [resolvable:$true] %s80
      %86 = dma.hbm_to_vmem [thread:$0]  %s79, 256, %s81, [#allocation8], 64, 64, 4
    $region37: #{tpu_custom_call.1} parent=1 // pred_fallthru
      _
    // Predicated region
    $region38: #{tpu_custom_call.1} parent=1 // pred_check
      _
    $region39: #{tpu_custom_call.1} parent=1 // pred_check_branch
      %88 = sbr.rel (0) target = $region41
    $region40: #{tpu_custom_call.1} parent=1 // pred_region
      _
    $region41: #{tpu_custom_call.1} parent=1 // pred_fallthru
      _
    // Predicated region
    $region42: #{tpu_custom_call.1} parent=1 // pred_check
      _
    $region43: #{tpu_custom_call.1} parent=1 // pred_check_branch
      %90 = sbr.rel (0) target = $region45
    $region44: #{tpu_custom_call.1} parent=1 // pred_region
      %92 = vsyncadd [#allocation8], 0
      %s93 = sshll.u32 %s10, 4
      %s94 = int_to_ptr.hbm [resolvable:$true] %s93
      %s95 = sshll.u32 [#allocation9], 4
      %s96 = int_to_ptr.vmem [resolvable:$true] %s95
      %101 = dma.hbm_to_vmem [thread:$0]  %s94, 256, %s96, [#allocation8], 64, 64, 4
    $region45: #{tpu_custom_call.1} parent=1 // pred_fallthru
      _
    // Predicated region
    $region46: #{tpu_custom_call.1} parent=1 // pred_check
      _
    $region47: #{tpu_custom_call.1} parent=1 // pred_check_branch
      %103 = sbr.rel (0) target = $region49
    $region48: #{tpu_custom_call.1} parent=1 // pred_region
      _
    $region49: #{tpu_custom_call.1} parent=1 // pred_fallthru
      _
    // Predicated region
    $region50: #{tpu_custom_call.1} parent=1 // pred_check
      _
    $region51: #{tpu_custom_call.1} parent=1 // pred_check_branch
      %105 = sbr.rel (0) target = $region53
    $region52: #{tpu_custom_call.1} parent=1 // pred_region
      %107 = vsyncadd [#allocation11], 0
      %s108 = sshll.u32 %s12, 4
      %s109 = int_to_ptr.hbm [resolvable:$true] %s108
      %s110 = sshll.u32 [#allocation10], 4
      %s111 = int_to_ptr.vmem [resolvable:$true] %s110
      %116 = dma.hbm_to_vmem [thread:$0]  %s109, 256, %s111, [#allocation11], 64, 64, 4
    $region53: #{tpu_custom_call.1} parent=1 // pred_fallthru
      _
    // Predicated region
    $region54: #{tpu_custom_call.1} parent=1 // pred_check
      _
    $region55: #{tpu_custom_call.1} parent=1 // pred_check_branch
      %118 = sbr.rel (0) target = $region57
    $region56: #{tpu_custom_call.1} parent=1 // pred_region
      _
    $region57: #{tpu_custom_call.1} parent=1 // pred_fallthru
      _
    // Predicated region
    $region58: #{tpu_custom_call.1} parent=1 // pred_check
      _
    $region59: #{tpu_custom_call.1} parent=1 // pred_check_branch
      %120 = sbr.rel (0) target = $region61
    $region60: #{tpu_custom_call.1} parent=1 // pred_region
      %122 = vsyncadd [#allocation11], 0
      %s123 = sshll.u32 %s14, 4
      %s124 = int_to_ptr.hbm [resolvable:$true] %s123
      %s125 = sshll.u32 [#allocation12], 4
      %s126 = int_to_ptr.vmem [resolvable:$true] %s125
      %131 = dma.hbm_to_vmem [thread:$0]  %s124, 256, %s126, [#allocation11], 64, 64, 4
    $region61: #{tpu_custom_call.1} parent=1 // pred_fallthru
      _
    // Predicated region
    $region62: #{tpu_custom_call.1} parent=1 // pred_check
      _
    $region63: #{tpu_custom_call.1} parent=1 // pred_check_branch
      %133 = sbr.rel (0) target = $region65
    $region64: #{tpu_custom_call.1} parent=1 // pred_region
      _
    $region65: #{tpu_custom_call.1} parent=1 // pred_fallthru
      _
    // Predicated region
    $region66: #{tpu_custom_call.1} parent=1 // pred_check
      _
    $region67: #{tpu_custom_call.1} parent=1 // pred_check_branch
      %135 = sbr.rel (0) target = $region69
    $region68: #{tpu_custom_call.1} parent=1 // pred_region
      %137 = vsyncadd [#allocation14], 0
      %s138 = sshll.u32 %s16, 4
      %s139 = int_to_ptr.hbm [resolvable:$true] %s138
      %s140 = sshll.u32 [#allocation13], 4
      %s141 = int_to_ptr.vmem [resolvable:$true] %s140
      %146 = dma.hbm_to_vmem [thread:$0]  %s139, 256, %s141, [#allocation14], 64, 64, 4
    $region69: #{tpu_custom_call.1} parent=1 // pred_fallthru
      _
    // Predicated region
    $region70: #{tpu_custom_call.1} parent=1 // pred_check
      _
    $region71: #{tpu_custom_call.1} parent=1 // pred_check_branch
      %148 = sbr.rel (0) target = $region73
    $region72: #{tpu_custom_call.1} parent=1 // pred_region
      _
    $region73: #{tpu_custom_call.1} parent=1 // pred_fallthru
      _
    // Predicated region
    $region74: #{tpu_custom_call.1} parent=1 // pred_check
      _
    $region75: #{tpu_custom_call.1} parent=1 // pred_check_branch
      %150 = sbr.rel (0) target = $region77
    $region76: #{tpu_custom_call.1} parent=1 // pred_region
      %152 = vsyncadd [#allocation14], 0
      %s153 = sshll.u32 %s18, 4
      %s154 = int_to_ptr.hbm [resolvable:$true] %s153
      %s155 = sshll.u32 [#allocation15], 4
      %s156 = int_to_ptr.vmem [resolvable:$true] %s155
      %161 = dma.hbm_to_vmem [thread:$0]  %s154, 256, %s156, [#allocation14], 64, 64, 4
    $region77: #{tpu_custom_call.1} parent=1 // pred_fallthru
      _
    // Predicated region
    $region78: #{tpu_custom_call.1} parent=1 // pred_check
      _
    $region79: #{tpu_custom_call.1} parent=1 // pred_check_branch
      %163 = sbr.rel (0) target = $region81
    $region80: #{tpu_custom_call.1} parent=1 // pred_region
      %165 = vsyncadd [#allocation17], 0
      %s167 = sshll.u32 %s19, 4
      %s168 = int_to_ptr.hbm [resolvable:$true] %s167
      %s169 = sshll.u32 [#allocation16], 4
      %s170 = int_to_ptr.vmem [resolvable:$true] %s169
      %172 = dma.hbm_to_vmem [thread:$0]  %s168, 16, %s170, [#allocation17]
    $region81: #{tpu_custom_call.1} parent=1 // pred_fallthru
      _
    // Predicated region
    $region82: #{tpu_custom_call.1} parent=1 // pred_check
      _
    $region83: #{tpu_custom_call.1} parent=1 // pred_check_branch
      %174 = sbr.rel (0) target = $region85
    $region84: #{tpu_custom_call.1} parent=1 // pred_region
      %176 = vsyncadd [#allocation17], 0
      %s178 = sshll.u32 %s20, 4
      %s179 = int_to_ptr.hbm [resolvable:$true] %s178
      %s180 = sshll.u32 [#allocation18], 4
      %s181 = int_to_ptr.vmem [resolvable:$true] %s180
      %183 = dma.hbm_to_vmem [thread:$0]  %s179, 16, %s181, [#allocation17]
    $region85: #{tpu_custom_call.1} parent=1 // pred_fallthru
      _
    // Predicated region
    $region86: #{tpu_custom_call.1} parent=1 // pred_check
      _
    $region87: #{tpu_custom_call.1} parent=1 // pred_check_branch
      %185 = sbr.rel (0) target = $region89
    $region88: #{tpu_custom_call.1} parent=1 // pred_region
      %187 = vsyncadd [#allocation20], 0
      %s189 = sshll.u32 %s21, 4
      %s190 = int_to_ptr.hbm [resolvable:$true] %s189
      %s191 = sshll.u32 [#allocation19], 4
      %s192 = int_to_ptr.vmem [resolvable:$true] %s191
      %194 = dma.hbm_to_vmem [thread:$0]  %s190, 16, %s192, [#allocation20]
    $region89: #{tpu_custom_call.1} parent=1 // pred_fallthru
      _
    // Predicated region
    $region90: #{tpu_custom_call.1} parent=1 // pred_check
      _
    $region91: #{tpu_custom_call.1} parent=1 // pred_check_branch
      %196 = sbr.rel (0) target = $region93
    $region92: #{tpu_custom_call.1} parent=1 // pred_region
      %198 = vsyncadd [#allocation20], 0
      %s199 = sshll.u32 %s22, 4
      %s200 = int_to_ptr.hbm [resolvable:$true] %s199
      %s201 = sshll.u32 [#allocation21], 4
      %s202 = int_to_ptr.vmem [resolvable:$true] %s201
      %207 = dma.hbm_to_vmem [thread:$0]  %s200, 256, %s202, [#allocation20], 64, 64, 4
    $region93: #{tpu_custom_call.1} parent=1 // pred_fallthru
      _
    // Predicated region
    $region94: #{tpu_custom_call.1} parent=1 // pred_check
      _
    $region95: #{tpu_custom_call.1} parent=1 // pred_check_branch
      %209 = sbr.rel (0) target = $region97
    $region96: #{tpu_custom_call.1} parent=1 // pred_region
      %211 = vsyncadd [#allocation23], 0
      %s213 = sshll.u32 %s23, 4
      %s214 = int_to_ptr.hbm [resolvable:$true] %s213
      %s215 = sshll.u32 [#allocation22], 4
      %s216 = int_to_ptr.vmem [resolvable:$true] %s215
      %218 = dma.hbm_to_vmem [thread:$0]  %s214, 16, %s216, [#allocation23]
    $region97: #{tpu_custom_call.1} parent=1 // pred_fallthru
      _
    // Predicated region
    $region98: #{tpu_custom_call.1} parent=1 // pred_check
      _
    $region99: #{tpu_custom_call.1} parent=1 // pred_check_branch
      %220 = sbr.rel (0) target = $region101
    $region100: #{tpu_custom_call.1} parent=1 // pred_region
      _
    $region101: #{tpu_custom_call.1} parent=1 // pred_fallthru
      _
    // Predicated region
    $region102: #{tpu_custom_call.1} parent=1 // pred_check
      _
    $region103: #{tpu_custom_call.1} parent=1 // pred_check_branch
      %222 = sbr.rel (0) target = $region105
    $region104: #{tpu_custom_call.1} parent=1 // pred_region
      %224 = vsyncadd [#allocation23], 0
      %s226 = sshll.u32 %s25, 4
      %s227 = int_to_ptr.hbm [resolvable:$true] %s226
      %s228 = sshll.u32 [#allocation24], 4
      %s229 = int_to_ptr.vmem [resolvable:$true] %s228
      %231 = dma.hbm_to_vmem [thread:$0]  %s227, 16, %s229, [#allocation23]
    $region105: #{tpu_custom_call.1} parent=1 // pred_fallthru
      _
    // Predicated region
    $region106: #{tpu_custom_call.1} parent=1 // pred_check
      _
    $region107: #{tpu_custom_call.1} parent=1 // pred_check_branch
      %233 = sbr.rel (0) target = $region109
    $region108: #{tpu_custom_call.1} parent=1 // pred_region
      %235 = dma.done [#allocation5], 16
    $region109: #{tpu_custom_call.1} parent=1 // pred_fallthru
      _
    // Predicated region
    $region110: #{tpu_custom_call.1} parent=1 // pred_check
      _
    $region111: #{tpu_custom_call.1} parent=1 // pred_check_branch
      %237 = sbr.rel (0) target = $region113
    $region112: #{tpu_custom_call.1} parent=1 // pred_region
      %239 = dma.done [#allocation3], 64
    $region113: #{tpu_custom_call.1} parent=1 // pred_fallthru
      _
    // Predicated region
    $region114: #{tpu_custom_call.1} parent=1 // pred_check
      _
    $region115: #{tpu_custom_call.1} parent=1 // pred_check_branch
      %241 = sbr.rel (0) target = $region117
    $region116: #{tpu_custom_call.1} parent=1 // pred_region
      %243 = dma.done [#allocation8], 256
    $region117: #{tpu_custom_call.1} parent=1 // pred_fallthru
      _
    // Predicated region
    $region118: #{tpu_custom_call.1} parent=1 // pred_check
      _
    $region119: #{tpu_custom_call.1} parent=1 // pred_check_branch
      %245 = sbr.rel (0) target = $region121
    $region120: #{tpu_custom_call.1} parent=1 // pred_region
      %247 = dma.done [#allocation8], 256
    $region121: #{tpu_custom_call.1} parent=1 // pred_fallthru
      _
    // Predicated region
    $region122: #{tpu_custom_call.1} parent=1 // pred_check
      _
    $region123: #{tpu_custom_call.1} parent=1 // pred_check_branch
      %249 = sbr.rel (0) target = $region125
    $region124: #{tpu_custom_call.1} parent=1 // pred_region
      %251 = dma.done [#allocation11], 256
    $region125: #{tpu_custom_call.1} parent=1 // pred_fallthru
      _
    // Predicated region
    $region126: #{tpu_custom_call.1} parent=1 // pred_check
      _
    $region127: #{tpu_custom_call.1} parent=1 // pred_check_branch
      %253 = sbr.rel (0) target = $region129
    $region128: #{tpu_custom_call.1} parent=1 // pred_region
      %255 = dma.done [#allocation11], 256
    $region129: #{tpu_custom_call.1} parent=1 // pred_fallthru
      _
    // Predicated region
    $region130: #{tpu_custom_call.1} parent=1 // pred_check
      _
    $region131: #{tpu_custom_call.1} parent=1 // pred_check_branch
      %257 = sbr.rel (0) target = $region133
    $region132: #{tpu_custom_call.1} parent=1 // pred_region
      %259 = dma.done [#allocation14], 256
    $region133: #{tpu_custom_call.1} parent=1 // pred_fallthru
      _
    // Predicated region
    $region134: #{tpu_custom_call.1} parent=1 // pred_check
      _
    $region135: #{tpu_custom_call.1} parent=1 // pred_check_branch
      %261 = sbr.rel (0) target = $region137
    $region136: #{tpu_custom_call.1} parent=1 // pred_region
      %263 = dma.done [#allocation14], 256
    $region137: #{tpu_custom_call.1} parent=1 // pred_fallthru
      _
    // Predicated region
    $region138: #{tpu_custom_call.1} parent=1 // pred_check
      _
    $region139: #{tpu_custom_call.1} parent=1 // pred_check_branch
      %265 = sbr.rel (0) target = $region141
    $region140: #{tpu_custom_call.1} parent=1 // pred_region
      %267 = dma.done [#allocation17], 16
    $region141: #{tpu_custom_call.1} parent=1 // pred_fallthru
      _
    // Predicated region
    $region142: #{tpu_custom_call.1} parent=1 // pred_check
      _
    $region143: #{tpu_custom_call.1} parent=1 // pred_check_branch
      %269 = sbr.rel (0) target = $region145
    $region144: #{tpu_custom_call.1} parent=1 // pred_region
      %271 = dma.done [#allocation17], 16
    $region145: #{tpu_custom_call.1} parent=1 // pred_fallthru
      _
    // Predicated region
    $region146: #{tpu_custom_call.1} parent=1 // pred_check
      _
    $region147: #{tpu_custom_call.1} parent=1 // pred_check_branch
      %273 = sbr.rel (0) target = $region149
    $region148: #{tpu_custom_call.1} parent=1 // pred_region
      %275 = dma.done [#allocation20], 16
    $region149: #{tpu_custom_call.1} parent=1 // pred_fallthru
      _
    // Predicated region
    $region150: #{tpu_custom_call.1} parent=1 // pred_check
      _
    $region151: #{tpu_custom_call.1} parent=1 // pred_check_branch
      %277 = sbr.rel (0) target = $region153
    $region152: #{tpu_custom_call.1} parent=1 // pred_region
      %279 = dma.done [#allocation20], 256
    $region153: #{tpu_custom_call.1} parent=1 // pred_fallthru
      _
    // Predicated region
    $region154: #{tpu_custom_call.1} parent=1 // pred_check
      _
    $region155: #{tpu_custom_call.1} parent=1 // pred_check_branch
      %281 = sbr.rel (0) target = $region157
    $region156: #{tpu_custom_call.1} parent=1 // pred_region
      %283 = dma.done [#allocation23], 16
    $region157: #{tpu_custom_call.1} parent=1 // pred_fallthru
      _
    // Predicated region
    $region158: #{tpu_custom_call.1} parent=1 // pred_check
      _
    $region159: #{tpu_custom_call.1} parent=1 // pred_check_branch
      %285 = sbr.rel (0) target = $region161
    $region160: #{tpu_custom_call.1} parent=1 // pred_region
      %287 = dma.done [#allocation23], 16
    $region161: #{tpu_custom_call.1} parent=1 // pred_fallthru
      _
    %288 = sfence
    %v290 = vld [vmem:[%s1] sm:$0xff]
    %v291 = vld [vmem:[%s1 + $0x8] sm:$0xff]
    %v292 = vld [vmem:[%s2] sm:$0xff]
    %v293 = vld [vmem:[%s2 + $0x8] sm:$0xff]
    %v294 = vld [vmem:[%s2 + $0x10] sm:$0xff]
    %v295 = vld [vmem:[%s2 + $0x18] sm:$0xff]
    %v296 = vld [vmem:[#allocation6] sm:$0x1]
    %v297 = vld [vmem:[#allocation6 + $0x1] sm:$0x1]
    %v298 = vld [vmem:[#allocation6 + $0x2] sm:$0x1]
    %v299 = vld [vmem:[#allocation6 + $0x3] sm:$0x1]
    %v300 = vld [vmem:[#allocation18] sm:$0x1]
    %v301 = vld [vmem:[#allocation19] sm:$0x1]
    %v302 = vpack.c.bf16 %v291, %v290
    %v303 = vld [vmem:[%s4] sm:$0xf]
    %v304 = vld [vmem:[%s4 + $0x4] sm:$0xf]
    %v305 = vld [vmem:[%s4 + $0x8] sm:$0xf]
    %v306 = vld [vmem:[%s4 + $0xc] sm:$0xf]
    %v307 = vld [vmem:[%s5] sm:$0x1]
    %v309 = vperm.slane %v307, 0
    %v315 = vunpack.c.l.b16 %v303
    %v316 = vunpack.c.l.b16 %v304
    %v317 = vunpack.c.l.b16 %v305
    %v318 = vunpack.c.l.b16 %v306
    %v319 = vpack.c.b16 %v316, %v315
    %v320 = vpack.c.b16 %v318, %v317
    %vm323 = vcmask 261120
    %v325 = vsel %vm323, %v302, 0
    %327 = vmatpush.bf16.msra.mxu0 0
    %328 = vmatpush.bf16.msra.mxu0 0
    %329 = vmatpush.bf16.msra.mxu0 0
    %330 = vmatpush.bf16.msra.mxu0 0
    %331 = vmatpush.bf16.msra.mxu0 0
    %332 = vmatpush.bf16.msra.mxu0 0
    %333 = vmatpush.bf16.msra.mxu0 %v320
    %334 = vmatpush.bf16.msra.mxu0 %v319
    %335 = vmatmul.bf16.gmra.mxu0 %v325
    %v336 = vpop.f32.mrf.mxu0
    %v337 = vadd.f32 %v309, %v336
    %v338 = vpop.f32.mrf.mxu0
    %v339 = vadd.f32 %v309, %v338
    %340 = vdwg.mxu0
    %v341 = vld [vmem:[%s6] sm:$0xf]
    %v342 = vld [vmem:[%s6 + $0x4] sm:$0xf]
    %v343 = vld [vmem:[%s6 + $0x8] sm:$0xf]
    %v344 = vld [vmem:[%s6 + $0xc] sm:$0xf]
    %v345 = vld [vmem:[%s7] sm:$0x1]
    %v347 = vperm.slane %v345, 0
    %v353 = vunpack.c.l.b16 %v341
    %v354 = vunpack.c.l.b16 %v342
    %v355 = vunpack.c.l.b16 %v343
    %v356 = vunpack.c.l.b16 %v344
    %v357 = vpack.c.b16 %v354, %v353
    %v358 = vpack.c.b16 %v356, %v355
    %361 = vmatpush.bf16.msra.mxu0 0
    %362 = vmatpush.bf16.msra.mxu0 0
    %363 = vmatpush.bf16.msra.mxu0 0
    %364 = vmatpush.bf16.msra.mxu0 0
    %365 = vmatpush.bf16.msra.mxu0 0
    %366 = vmatpush.bf16.msra.mxu0 0
    %367 = vmatpush.bf16.msra.mxu0 %v358
    %368 = vmatpush.bf16.msra.mxu0 %v357
    %369 = vmatmul.bf16.gmra.mxu0 %v325
    %v370 = vpop.f32.mrf.mxu0
    %v371 = vadd.f32 %v347, %v370
    %v372 = vpop.f32.mrf.mxu0
    %v373 = vadd.f32 %v347, %v372
    %374 = vdwg.mxu0
    %v375 = vld [vmem:[#allocation7] sm:$0xf]
    %v376 = vld [vmem:[#allocation7 + $0x4] sm:$0xf]
    %v377 = vld [vmem:[#allocation7 + $0x8] sm:$0xf]
    %v378 = vld [vmem:[#allocation7 + $0xc] sm:$0xf]
    %v379 = vld [vmem:[%s9] sm:$0x1]
    %v381 = vperm.slane %v379, 0
    %v387 = vunpack.c.l.b16 %v375
    %v388 = vunpack.c.l.b16 %v376
    %v389 = vunpack.c.l.b16 %v377
    %v390 = vunpack.c.l.b16 %v378
    %v391 = vpack.c.b16 %v388, %v387
    %v392 = vpack.c.b16 %v390, %v389
    %395 = vmatpush.bf16.msra.mxu0 0
    %396 = vmatpush.bf16.msra.mxu0 0
    %397 = vmatpush.bf16.msra.mxu0 0
    %398 = vmatpush.bf16.msra.mxu0 0
    %399 = vmatpush.bf16.msra.mxu0 0
    %400 = vmatpush.bf16.msra.mxu0 0
    %401 = vmatpush.bf16.msra.mxu0 %v392
    %402 = vmatpush.bf16.msra.mxu0 %v391
    %403 = vmatmul.bf16.gmra.mxu0 %v325
    %v404 = vpop.f32.mrf.mxu0
    %v405 = vadd.f32 %v381, %v404
    %v406 = vpop.f32.mrf.mxu0
    %v407 = vadd.f32 %v381, %v406
    %408 = vdwg.mxu0
    %v409 = vpack.c.bf16 %v371, %v371
    %v410 = vpack.c.bf16 %v373, %v373
    %v412 = vperm.slane %v296, 0
    %v414 = vmul.f32 %v337, %v412
    %v415 = vmul.f32 %v339, %v412
    %v416 = vpack.c.bf16 %v414, %v414
    %v417 = vpack.c.bf16 %v415, %v415
    %v418 = vmul.f32 %v405, %v412
    %v419 = vmul.f32 %v407, %v412
    %v420 = vpack.c.bf16 %v418, %v418
    %v421 = vpack.c.bf16 %v419, %v419
    %v423 = vsel %vm323, %v416, 0
    %v426 = vsel %vm323, %v409, 0
    %428 = vmatpush.bf16.xpose.msra.mxu0 0
    %429 = vmatpush.bf16.xpose.msra.mxu0 0
    %430 = vmatpush.bf16.xpose.msra.mxu0 0
    %431 = vmatpush.bf16.xpose.msra.mxu0 0
    %432 = vmatpush.bf16.xpose.msra.mxu0 0
    %433 = vmatpush.bf16.xpose.msra.mxu0 0
    %434 = vmatpush.bf16.xpose.msra.mxu0 0
    %435 = vmatpush.bf16.xpose.msra.mxu0 %v426
    %436 = vmatmul.bf16.gmra.mxu0 %v423
    %v437 = vpop.f32.mrf.mxu0
    %v438 = vadd.f32 0.0, %v437
    %v439 = vpop.f32.mrf.mxu0
    %440 = vdwg.mxu0
    %v442 = vsel %vm323, %v417, 0
    %v445 = vsel %vm323, %v410, 0
    %447 = vmatpush.bf16.xpose.msra.mxu0 0
    %448 = vmatpush.bf16.xpose.msra.mxu0 0
    %449 = vmatpush.bf16.xpose.msra.mxu0 0
    %450 = vmatpush.bf16.xpose.msra.mxu0 0
    %451 = vmatpush.bf16.xpose.msra.mxu0 0
    %452 = vmatpush.bf16.xpose.msra.mxu0 0
    %453 = vmatpush.bf16.xpose.msra.mxu0 0
    %454 = vmatpush.bf16.xpose.msra.mxu0 %v445
    %455 = vmatmul.bf16.gmra.mxu0 %v442
    %v456 = vpop.f32.mrf.mxu0
    %v457 = vadd.f32 0.0, %v456
    %v458 = vpop.f32.mrf.mxu0
    %459 = vdwg.mxu0
    %v460 = vmul.f32 %v438, 0.35355338
    %v461 = vmul.f32 %v457, 0.35355338
    %vm462 = vcmask 64512
    %v463 = vsel %vm462, %v460, -inf
    %464 = vmax.xlane.f32.xlu0 %v463
    %v465 = vpop.xlane.xlu0 %464
    %v466 = vsel %vm462, %v461, -inf
    %467 = vmax.xlane.f32.xlu0 %v466
    %v468 = vpop.xlane.xlu0 %467
    %v469 = vsub.f32 %v460, %v465
    %v470 = vsub.f32 %v461, %v468
    %v471 = vmul.f32 %v469, 1.442695
    %v472 = vpow.pop %v471
    %v473 = vmul.f32 %v470, 1.442695
    %v474 = vpow.pop %v473
    %v475 = vsel %vm462, %v472, 0.0
    %476 = vadd.xlane.f32.xlu0 %v475
    %v477 = vpop.xlane.xlu0 %476
    %v478 = vsel %vm462, %v474, 0.0
    %479 = vadd.xlane.f32.xlu0 %v478
    %v480 = vpop.xlane.xlu0 %479
    %v481 = vrcp.pop %v477
    %v482 = vmul.f32 %v477, %v481
    %v483 = vsub.f32 1.0, %v482
    %v484 = vmul.f32 %v481, %v483
    %v485 = vadd.f32 %v481, %v484
    %vm486 = vweird.f32 %v477
    %vm487 = vweird.f32 %v481
    %vm488 = vmor %vm486, %vm487
    %v489 = vsel %vm488, %v481, %v485
    %v490 = vand.u32 2147483647, %v477
    %vm491 = vcmp.eq.f32.partialorder %v490, 8.507059e+37
    %v492 = vand.u32 %v477, 2147483648
    %v493 = vor.u32 1.1754944e-38, %v492
    %v494 = vsel %vm491, %v493, %v489
    %v495 = vmul.f32 %v472, %v494
    %v496 = vrcp.pop %v480
    %v497 = vmul.f32 %v480, %v496
    %v498 = vsub.f32 1.0, %v497
    %v499 = vmul.f32 %v496, %v498
    %v500 = vadd.f32 %v496, %v499
    %vm501 = vweird.f32 %v480
    %vm502 = vweird.f32 %v496
    %vm503 = vmor %vm501, %vm502
    %v504 = vsel %vm503, %v496, %v500
    %v505 = vand.u32 2147483647, %v480
    %vm506 = vcmp.eq.f32.partialorder %v505, 8.507059e+37
    %v507 = vand.u32 %v480, 2147483648
    %v508 = vor.u32 1.1754944e-38, %v507
    %v509 = vsel %vm506, %v508, %v504
    %v510 = vmul.f32 %v474, %v509
    %v511 = vpack.c.bf16 %v495, %v495
    %v512 = vpack.c.bf16 %v510, %v510
    %v514 = vperm.slane %v297, 0
    %v516 = vmul.f32 %v337, %v514
    %v517 = vmul.f32 %v339, %v514
    %v518 = vpack.c.bf16 %v516, %v516
    %v519 = vpack.c.bf16 %v517, %v517
    %v520 = vmul.f32 %v405, %v514
    %v521 = vmul.f32 %v407, %v514
    %v522 = vpack.c.bf16 %v520, %v520
    %v523 = vpack.c.bf16 %v521, %v521
    %v525 = vsel %vm323, %v518, 0
    %527 = vmatpush.bf16.xpose.msra.mxu0 0
    %528 = vmatpush.bf16.xpose.msra.mxu0 0
    %529 = vmatpush.bf16.xpose.msra.mxu0 0
    %530 = vmatpush.bf16.xpose.msra.mxu0 0
    %531 = vmatpush.bf16.xpose.msra.mxu0 0
    %532 = vmatpush.bf16.xpose.msra.mxu0 0
    %533 = vmatpush.bf16.xpose.msra.mxu0 0
    %534 = vmatpush.bf16.xpose.msra.mxu0 %v426
    %535 = vmatmul.bf16.gmra.mxu0 %v525
    %v536 = vpop.f32.mrf.mxu0
    %v537 = vadd.f32 0.0, %v536
    %v538 = vpop.f32.mrf.mxu0
    %539 = vdwg.mxu0
    %v541 = vsel %vm323, %v519, 0
    %543 = vmatpush.bf16.xpose.msra.mxu0 0
    %544 = vmatpush.bf16.xpose.msra.mxu0 0
    %545 = vmatpush.bf16.xpose.msra.mxu0 0
    %546 = vmatpush.bf16.xpose.msra.mxu0 0
    %547 = vmatpush.bf16.xpose.msra.mxu0 0
    %548 = vmatpush.bf16.xpose.msra.mxu0 0
    %549 = vmatpush.bf16.xpose.msra.mxu0 0
    %550 = vmatpush.bf16.xpose.msra.mxu0 %v445
    %551 = vmatmul.bf16.gmra.mxu0 %v541
    %v552 = vpop.f32.mrf.mxu0
    %v553 = vadd.f32 0.0, %v552
    %v554 = vpop.f32.mrf.mxu0
    %555 = vdwg.mxu0
    %v556 = vmul.f32 %v537, 0.35355338
    %v557 = vmul.f32 %v553, 0.35355338
    %v558 = vsel %vm462, %v556, -inf
    %559 = vmax.xlane.f32.xlu0 %v558
    %v560 = vpop.xlane.xlu0 %559
    %v561 = vsel %vm462, %v557, -inf
    %562 = vmax.xlane.f32.xlu0 %v561
    %v563 = vpop.xlane.xlu0 %562
    %v564 = vsub.f32 %v556, %v560
    %v565 = vsub.f32 %v557, %v563
    %v566 = vmul.f32 %v564, 1.442695
    %v567 = vpow.pop %v566
    %v568 = vmul.f32 %v565, 1.442695
    %v569 = vpow.pop %v568
    %v570 = vsel %vm462, %v567, 0.0
    %571 = vadd.xlane.f32.xlu0 %v570
    %v572 = vpop.xlane.xlu0 %571
    %v573 = vsel %vm462, %v569, 0.0
    %574 = vadd.xlane.f32.xlu0 %v573
    %v575 = vpop.xlane.xlu0 %574
    %v576 = vrcp.pop %v572
    %v577 = vmul.f32 %v572, %v576
    %v578 = vsub.f32 1.0, %v577
    %v579 = vmul.f32 %v576, %v578
    %v580 = vadd.f32 %v576, %v579
    %vm581 = vweird.f32 %v572
    %vm582 = vweird.f32 %v576
    %vm583 = vmor %vm581, %vm582
    %v584 = vsel %vm583, %v576, %v580
    %v585 = vand.u32 2147483647, %v572
    %vm586 = vcmp.eq.f32.partialorder %v585, 8.507059e+37
    %v587 = vand.u32 %v572, 2147483648
    %v588 = vor.u32 1.1754944e-38, %v587
    %v589 = vsel %vm586, %v588, %v584
    %v590 = vmul.f32 %v567, %v589
    %v591 = vrcp.pop %v575
    %v592 = vmul.f32 %v575, %v591
    %v593 = vsub.f32 1.0, %v592
    %v594 = vmul.f32 %v591, %v593
    %v595 = vadd.f32 %v591, %v594
    %vm596 = vweird.f32 %v575
    %vm597 = vweird.f32 %v591
    %vm598 = vmor %vm596, %vm597
    %v599 = vsel %vm598, %v591, %v595
    %v600 = vand.u32 2147483647, %v575
    %vm601 = vcmp.eq.f32.partialorder %v600, 8.507059e+37
    %v602 = vand.u32 %v575, 2147483648
    %v603 = vor.u32 1.1754944e-38, %v602
    %v604 = vsel %vm601, %v603, %v599
    %v605 = vmul.f32 %v569, %v604
    %v606 = vpack.c.bf16 %v590, %v590
    %v607 = vpack.c.bf16 %v605, %v605
    %v609 = vsel %vm462, %v606, 0
    %vm611 = vcmask 1043456
    %v613 = vsel %vm611, %v522, 0
    %615 = vmatpush.bf16.msra.mxu0 0
    %616 = vmatpush.bf16.msra.mxu0 0
    %617 = vmatpush.bf16.msra.mxu0 0
    %618 = vmatpush.bf16.msra.mxu0 0
    %619 = vmatpush.bf16.msra.mxu0 0
    %620 = vmatpush.bf16.msra.mxu0 0
    %621 = vmatpush.bf16.msra.mxu0 0
    %622 = vmatpush.bf16.msra.mxu0 %v613
    %623 = vmatmul.bf16.gmra.mxu0 %v609
    %v624 = vpop.f32.mrf.mxu0
    %v625 = vadd.f32 0.0, %v624
    %v626 = vpop.f32.mrf.mxu0
    %627 = vdwg.mxu0
    %v629 = vsel %vm462, %v607, 0
    %v632 = vsel %vm611, %v523, 0
    %634 = vmatpush.bf16.msra.mxu0 0
    %635 = vmatpush.bf16.msra.mxu0 0
    %636 = vmatpush.bf16.msra.mxu0 0
    %637 = vmatpush.bf16.msra.mxu0 0
    %638 = vmatpush.bf16.msra.mxu0 0
    %639 = vmatpush.bf16.msra.mxu0 0
    %640 = vmatpush.bf16.msra.mxu0 0
    %641 = vmatpush.bf16.msra.mxu0 %v632
    %642 = vmatmul.bf16.gmra.mxu0 %v629
    %v643 = vpop.f32.mrf.mxu0
    %v644 = vadd.f32 0.0, %v643
    %v645 = vpop.f32.mrf.mxu0
    %646 = vdwg.mxu0
    %v648 = vperm.slane %v298, 0
    %v650 = vmul.f32 %v337, %v648
    %v651 = vmul.f32 %v339, %v648
    %v652 = vpack.c.bf16 %v650, %v650
    %v653 = vpack.c.bf16 %v651, %v651
    %v654 = vmul.f32 %v405, %v648
    %v655 = vmul.f32 %v407, %v648
    %v656 = vpack.c.bf16 %v654, %v654
    %v657 = vpack.c.bf16 %v655, %v655
    %v659 = vsel %vm323, %v652, 0
    %661 = vmatpush.bf16.xpose.msra.mxu0 0
    %662 = vmatpush.bf16.xpose.msra.mxu0 0
    %663 = vmatpush.bf16.xpose.msra.mxu0 0
    %664 = vmatpush.bf16.xpose.msra.mxu0 0
    %665 = vmatpush.bf16.xpose.msra.mxu0 0
    %666 = vmatpush.bf16.xpose.msra.mxu0 0
    %667 = vmatpush.bf16.xpose.msra.mxu0 0
    %668 = vmatpush.bf16.xpose.msra.mxu0 %v426
    %669 = vmatmul.bf16.gmra.mxu0 %v659
    %v670 = vpop.f32.mrf.mxu0
    %v671 = vadd.f32 0.0, %v670
    %v672 = vpop.f32.mrf.mxu0
    %673 = vdwg.mxu0
    %v675 = vsel %vm323, %v653, 0
    %677 = vmatpush.bf16.xpose.msra.mxu0 0
    %678 = vmatpush.bf16.xpose.msra.mxu0 0
    %679 = vmatpush.bf16.xpose.msra.mxu0 0
    %680 = vmatpush.bf16.xpose.msra.mxu0 0
    %681 = vmatpush.bf16.xpose.msra.mxu0 0
    %682 = vmatpush.bf16.xpose.msra.mxu0 0
    %683 = vmatpush.bf16.xpose.msra.mxu0 0
    %684 = vmatpush.bf16.xpose.msra.mxu0 %v445
    %685 = vmatmul.bf16.gmra.mxu0 %v675
    %v686 = vpop.f32.mrf.mxu0
    %v687 = vadd.f32 0.0, %v686
    %v688 = vpop.f32.mrf.mxu0
    %689 = vdwg.mxu0
    %v690 = vmul.f32 %v671, 0.35355338
    %v691 = vmul.f32 %v687, 0.35355338
    %v692 = vsel %vm462, %v690, -inf
    %693 = vmax.xlane.f32.xlu0 %v692
    %v694 = vpop.xlane.xlu0 %693
    %v695 = vsel %vm462, %v691, -inf
    %696 = vmax.xlane.f32.xlu0 %v695
    %v697 = vpop.xlane.xlu0 %696
    %v698 = vsub.f32 %v690, %v694
    %v699 = vsub.f32 %v691, %v697
    %v700 = vmul.f32 %v698, 1.442695
    %v701 = vpow.pop %v700
    %v702 = vmul.f32 %v699, 1.442695
    %v703 = vpow.pop %v702
    %v704 = vsel %vm462, %v701, 0.0
    %705 = vadd.xlane.f32.xlu0 %v704
    %v706 = vpop.xlane.xlu0 %705
    %v707 = vsel %vm462, %v703, 0.0
    %708 = vadd.xlane.f32.xlu0 %v707
    %v709 = vpop.xlane.xlu0 %708
    %v710 = vrcp.pop %v706
    %v711 = vmul.f32 %v706, %v710
    %v712 = vsub.f32 1.0, %v711
    %v713 = vmul.f32 %v710, %v712
    %v714 = vadd.f32 %v710, %v713
    %vm715 = vweird.f32 %v706
    %vm716 = vweird.f32 %v710
    %vm717 = vmor %vm715, %vm716
    %v718 = vsel %vm717, %v710, %v714
    %v719 = vand.u32 2147483647, %v706
    %vm720 = vcmp.eq.f32.partialorder %v719, 8.507059e+37
    %v721 = vand.u32 %v706, 2147483648
    %v722 = vor.u32 1.1754944e-38, %v721
    %v723 = vsel %vm720, %v722, %v718
    %v724 = vmul.f32 %v701, %v723
    %v725 = vrcp.pop %v709
    %v726 = vmul.f32 %v709, %v725
    %v727 = vsub.f32 1.0, %v726
    %v728 = vmul.f32 %v725, %v727
    %v729 = vadd.f32 %v725, %v728
    %vm730 = vweird.f32 %v709
    %vm731 = vweird.f32 %v725
    %vm732 = vmor %vm730, %vm731
    %v733 = vsel %vm732, %v725, %v729
    %v734 = vand.u32 2147483647, %v709
    %vm735 = vcmp.eq.f32.partialorder %v734, 8.507059e+37
    %v736 = vand.u32 %v709, 2147483648
    %v737 = vor.u32 1.1754944e-38, %v736
    %v738 = vsel %vm735, %v737, %v733
    %v739 = vmul.f32 %v703, %v738
    %v740 = vpack.c.bf16 %v724, %v724
    %v741 = vpack.c.bf16 %v739, %v739
    %v743 = vperm.slane %v299, 0
    %v745 = vmul.f32 %v337, %v743
    %v746 = vmul.f32 %v339, %v743
    %v747 = vpack.c.bf16 %v745, %v745
    %v748 = vpack.c.bf16 %v746, %v746
    %v749 = vmul.f32 %v405, %v743
    %v750 = vmul.f32 %v407, %v743
    %v751 = vpack.c.bf16 %v749, %v749
    %v752 = vpack.c.bf16 %v750, %v750
    %v754 = vsel %vm323, %v747, 0
    %756 = vmatpush.bf16.xpose.msra.mxu0 0
    %757 = vmatpush.bf16.xpose.msra.mxu0 0
    %758 = vmatpush.bf16.xpose.msra.mxu0 0
    %759 = vmatpush.bf16.xpose.msra.mxu0 0
    %760 = vmatpush.bf16.xpose.msra.mxu0 0
    %761 = vmatpush.bf16.xpose.msra.mxu0 0
    %762 = vmatpush.bf16.xpose.msra.mxu0 0
    %763 = vmatpush.bf16.xpose.msra.mxu0 %v426
    %764 = vmatmul.bf16.gmra.mxu0 %v754
    %v765 = vpop.f32.mrf.mxu0
    %v766 = vadd.f32 0.0, %v765
    %v767 = vpop.f32.mrf.mxu0
    %768 = vdwg.mxu0
    %v770 = vsel %vm323, %v748, 0
    %772 = vmatpush.bf16.xpose.msra.mxu0 0
    %773 = vmatpush.bf16.xpose.msra.mxu0 0
    %774 = vmatpush.bf16.xpose.msra.mxu0 0
    %775 = vmatpush.bf16.xpose.msra.mxu0 0
    %776 = vmatpush.bf16.xpose.msra.mxu0 0
    %777 = vmatpush.bf16.xpose.msra.mxu0 0
    %778 = vmatpush.bf16.xpose.msra.mxu0 0
    %779 = vmatpush.bf16.xpose.msra.mxu0 %v445
    %780 = vmatmul.bf16.gmra.mxu0 %v770
    %v781 = vpop.f32.mrf.mxu0
    %v782 = vadd.f32 0.0, %v781
    %v783 = vpop.f32.mrf.mxu0
    %784 = vdwg.mxu0
    %v785 = vmul.f32 %v766, 0.35355338
    %v786 = vmul.f32 %v782, 0.35355338
    %v787 = vsel %vm462, %v785, -inf
    %788 = vmax.xlane.f32.xlu0 %v787
    %v789 = vpop.xlane.xlu0 %788
    %v790 = vsel %vm462, %v786, -inf
    %791 = vmax.xlane.f32.xlu0 %v790
    %v792 = vpop.xlane.xlu0 %791
    %v793 = vsub.f32 %v785, %v789
    %v794 = vsub.f32 %v786, %v792
    %v795 = vmul.f32 %v793, 1.442695
    %v796 = vpow.pop %v795
    %v797 = vmul.f32 %v794, 1.442695
    %v798 = vpow.pop %v797
    %v799 = vsel %vm462, %v796, 0.0
    %800 = vadd.xlane.f32.xlu0 %v799
    %v801 = vpop.xlane.xlu0 %800
    %v802 = vsel %vm462, %v798, 0.0
    %803 = vadd.xlane.f32.xlu0 %v802
    %v804 = vpop.xlane.xlu0 %803
    %v805 = vrcp.pop %v801
    %v806 = vmul.f32 %v801, %v805
    %v807 = vsub.f32 1.0, %v806
    %v808 = vmul.f32 %v805, %v807
    %v809 = vadd.f32 %v805, %v808
    %vm810 = vweird.f32 %v801
    %vm811 = vweird.f32 %v805
    %vm812 = vmor %vm810, %vm811
    %v813 = vsel %vm812, %v805, %v809
    %v814 = vand.u32 2147483647, %v801
    %vm815 = vcmp.eq.f32.partialorder %v814, 8.507059e+37
    %v816 = vand.u32 %v801, 2147483648
    %v817 = vor.u32 1.1754944e-38, %v816
    %v818 = vsel %vm815, %v817, %v813
    %v819 = vmul.f32 %v796, %v818
    %v820 = vrcp.pop %v804
    %v821 = vmul.f32 %v804, %v820
    %v822 = vsub.f32 1.0, %v821
    %v823 = vmul.f32 %v820, %v822
    %v824 = vadd.f32 %v820, %v823
    %vm825 = vweird.f32 %v804
    %vm826 = vweird.f32 %v820
    %vm827 = vmor %vm825, %vm826
    %v828 = vsel %vm827, %v820, %v824
    %v829 = vand.u32 2147483647, %v804
    %vm830 = vcmp.eq.f32.partialorder %v829, 8.507059e+37
    %v831 = vand.u32 %v804, 2147483648
    %v832 = vor.u32 1.1754944e-38, %v831
    %v833 = vsel %vm830, %v832, %v828
    %v834 = vmul.f32 %v798, %v833
    %v835 = vpack.c.bf16 %v819, %v819
    %v836 = vpack.c.bf16 %v834, %v834
    %v838 = vsel %vm462, %v835, 0
    %v841 = vsel %vm611, %v751, 0
    %843 = vmatpush.bf16.msra.mxu0 0
    %844 = vmatpush.bf16.msra.mxu0 0
    %845 = vmatpush.bf16.msra.mxu0 0
    %846 = vmatpush.bf16.msra.mxu0 0
    %847 = vmatpush.bf16.msra.mxu0 0
    %848 = vmatpush.bf16.msra.mxu0 0
    %849 = vmatpush.bf16.msra.mxu0 0
    %850 = vmatpush.bf16.msra.mxu0 %v841
    %851 = vmatmul.bf16.gmra.mxu0 %v838
    %v852 = vpop.f32.mrf.mxu0
    %v853 = vadd.f32 0.0, %v852
    %v854 = vpop.f32.mrf.mxu0
    %855 = vdwg.mxu0
    %v857 = vsel %vm462, %v836, 0
    %v860 = vsel %vm611, %v752, 0
    %862 = vmatpush.bf16.msra.mxu0 0
    %863 = vmatpush.bf16.msra.mxu0 0
    %864 = vmatpush.bf16.msra.mxu0 0
    %865 = vmatpush.bf16.msra.mxu0 0
    %866 = vmatpush.bf16.msra.mxu0 0
    %867 = vmatpush.bf16.msra.mxu0 0
    %868 = vmatpush.bf16.msra.mxu0 0
    %869 = vmatpush.bf16.msra.mxu0 %v860
    %870 = vmatmul.bf16.gmra.mxu0 %v857
    %v871 = vpop.f32.mrf.mxu0
    %v872 = vadd.f32 0.0, %v871
    %v873 = vpop.f32.mrf.mxu0
    %874 = vdwg.mxu0
    %v876 = vsel %vm462, %v511, 0
    %v879 = vsel %vm611, %v420, 0
    %881 = vmatpush.bf16.msra.mxu0 0
    %882 = vmatpush.bf16.msra.mxu0 0
    %883 = vmatpush.bf16.msra.mxu0 0
    %884 = vmatpush.bf16.msra.mxu0 0
    %885 = vmatpush.bf16.msra.mxu0 0
    %886 = vmatpush.bf16.msra.mxu0 0
    %887 = vmatpush.bf16.msra.mxu0 0
    %888 = vmatpush.bf16.msra.mxu0 %v879
    %889 = vmatmul.bf16.gmra.mxu0 %v876
    %v890 = vpop.f32.mrf.mxu0
    %v891 = vadd.f32 %v625, %v890
    %v892 = vpop.f32.mrf.mxu0
    %893 = vdwg.mxu0
    %v895 = vsel %vm462, %v512, 0
    %v898 = vsel %vm611, %v421, 0
    %900 = vmatpush.bf16.msra.mxu0 0
    %901 = vmatpush.bf16.msra.mxu0 0
    %902 = vmatpush.bf16.msra.mxu0 0
    %903 = vmatpush.bf16.msra.mxu0 0
    %904 = vmatpush.bf16.msra.mxu0 0
    %905 = vmatpush.bf16.msra.mxu0 0
    %906 = vmatpush.bf16.msra.mxu0 0
    %907 = vmatpush.bf16.msra.mxu0 %v898
    %908 = vmatmul.bf16.gmra.mxu0 %v895
    %v909 = vpop.f32.mrf.mxu0
    %v910 = vadd.f32 %v644, %v909
    %v911 = vpop.f32.mrf.mxu0
    %912 = vdwg.mxu0
    %v914 = vsel %vm462, %v740, 0
    %v917 = vsel %vm611, %v656, 0
    %919 = vmatpush.bf16.msra.mxu0 0
    %920 = vmatpush.bf16.msra.mxu0 0
    %921 = vmatpush.bf16.msra.mxu0 0
    %922 = vmatpush.bf16.msra.mxu0 0
    %923 = vmatpush.bf16.msra.mxu0 0
    %924 = vmatpush.bf16.msra.mxu0 0
    %925 = vmatpush.bf16.msra.mxu0 0
    %926 = vmatpush.bf16.msra.mxu0 %v917
    %927 = vmatmul.bf16.gmra.mxu0 %v914
    %v928 = vpop.f32.mrf.mxu0
    %v929 = vadd.f32 %v853, %v928
    %v930 = vpop.f32.mrf.mxu0
    %931 = vdwg.mxu0
    %v933 = vsel %vm462, %v741, 0
    %v936 = vsel %vm611, %v657, 0
    %938 = vmatpush.bf16.msra.mxu0 0
    %939 = vmatpush.bf16.msra.mxu0 0
    %940 = vmatpush.bf16.msra.mxu0 0
    %941 = vmatpush.bf16.msra.mxu0 0
    %942 = vmatpush.bf16.msra.mxu0 0
    %943 = vmatpush.bf16.msra.mxu0 0
    %944 = vmatpush.bf16.msra.mxu0 0
    %945 = vmatpush.bf16.msra.mxu0 %v936
    %946 = vmatmul.bf16.gmra.mxu0 %v933
    %v947 = vpop.f32.mrf.mxu0
    %v948 = vadd.f32 %v872, %v947
    %v949 = vpop.f32.mrf.mxu0
    %950 = vdwg.mxu0
    %v951 = vadd.f32 %v891, %v929
    %v952 = vadd.f32 %v910, %v948
    %v953 = vpack.c.bf16 %v952, %v951
    %v954 = vld [vmem:[#allocation9] sm:$0xf]
    %v955 = vld [vmem:[#allocation9 + $0x4] sm:$0xf]
    %v956 = vld [vmem:[#allocation9 + $0x8] sm:$0xf]
    %v957 = vld [vmem:[#allocation9 + $0xc] sm:$0xf]
    %v958 = vld [vmem:[%s11] sm:$0x1]
    %v960 = vperm.slane %v958, 0
    %v966 = vunpack.c.l.b16 %v954
    %v967 = vunpack.c.l.b16 %v955
    %v968 = vunpack.c.l.b16 %v956
    %v969 = vunpack.c.l.b16 %v957
    %v970 = vpack.c.b16 %v967, %v966
    %v971 = vpack.c.b16 %v969, %v968
    %v975 = vsel %vm323, %v953, 0
    %977 = vmatpush.bf16.msra.mxu0 0
    %978 = vmatpush.bf16.msra.mxu0 0
    %979 = vmatpush.bf16.msra.mxu0 0
    %980 = vmatpush.bf16.msra.mxu0 0
    %981 = vmatpush.bf16.msra.mxu0 0
    %982 = vmatpush.bf16.msra.mxu0 0
    %983 = vmatpush.bf16.msra.mxu0 %v971
    %984 = vmatpush.bf16.msra.mxu0 %v970
    %985 = vmatmul.bf16.gmra.mxu0 %v975
    %v986 = vpop.f32.mrf.mxu0
    %v987 = vadd.f32 %v960, %v986
    %v988 = vpop.f32.mrf.mxu0
    %v989 = vadd.f32 %v960, %v988
    %990 = vdwg.mxu0
    %v991 = vadd.f32 %v290, %v987
    %v992 = vadd.f32 %v291, %v989
    %v993 = vsel %vm323, %v991, 0.0
    %994 = vadd.xlane.f32.xlu0 %v993
    %v995 = vpop.xlane.xlu0 %994
    %v996 = vsel %vm323, %v992, 0.0
    %997 = vadd.xlane.f32.xlu0 %v996
    %v998 = vpop.xlane.xlu0 %997
    %v999 = vrcp.pop 32.0
    %v1000 = vmul.f32 32.0, %v999
    %v1001 = vsub.f32 1.0, %v1000
    %v1002 = vmul.f32 %v999, %v1001
    %v1003 = vadd.f32 %v999, %v1002
    %vm1004 = vweird.f32 %v999
    %v1005 = vsel %vm1004, %v999, %v1003
    %v1006 = vmul.f32 %v995, %v1005
    %v1007 = vmul.f32 %v998, %v1005
    %v1008 = vmul.f32 %v991, %v991
    %v1009 = vmul.f32 %v992, %v992
    %v1010 = vsel %vm323, %v1008, 0.0
    %1011 = vadd.xlane.f32.xlu0 %v1010
    %v1012 = vpop.xlane.xlu0 %1011
    %v1013 = vsel %vm323, %v1009, 0.0
    %1014 = vadd.xlane.f32.xlu0 %v1013
    %v1015 = vpop.xlane.xlu0 %1014
    %v1016 = vmul.f32 %v1012, %v1005
    %v1017 = vmul.f32 %v1015, %v1005
    %v1018 = vmul.f32 %v1006, %v1006
    %v1019 = vmul.f32 %v1007, %v1007
    %v1020 = vsub.f32 %v1016, %v1018
    %v1021 = vsub.f32 %v1017, %v1019
    %v1022 = vsub.f32 %v991, %v1006
    %v1023 = vsub.f32 %v992, %v1007
    %v1024 = vadd.f32 %v1020, 1e-05
    %v1025 = vadd.f32 %v1021, 1e-05
    %v1026 = vrsqrt.pop %v1024
    %v1027 = vmul.f32 %v1026, %v1024
    %v1028 = vmul.f32 %v1027, %v1026
    %v1029 = vmul.f32 0.5, %v1028
    %v1030 = vsub.f32 1.5, %v1029
    %v1031 = vmul.f32 %v1026, %v1030
    %vm1032 = vweird.f32 %v1024
    %vm1033 = vweird.f32 %v1026
    %vm1034 = vmor %vm1032, %vm1033
    %v1035 = vsel %vm1034, %v1026, %v1031
    %v1036 = vrsqrt.pop %v1025
    %v1037 = vmul.f32 %v1036, %v1025
    %v1038 = vmul.f32 %v1037, %v1036
    %v1039 = vmul.f32 0.5, %v1038
    %v1040 = vsub.f32 1.5, %v1039
    %v1041 = vmul.f32 %v1036, %v1040
    %vm1042 = vweird.f32 %v1025
    %vm1043 = vweird.f32 %v1036
    %vm1044 = vmor %vm1042, %vm1043
    %v1045 = vsel %vm1044, %v1036, %v1041
    %v1046 = vmul.f32 %v1022, %v1035
    %v1047 = vmul.f32 %v1023, %v1045
    %v1049 = vperm.slane %v300, 0
    %v1051 = vmul.f32 %v1046, %v1049
    %v1052 = vmul.f32 %v1047, %v1049
    %v1054 = vperm.slane %v301, 0
    %v1056 = vadd.f32 %v1051, %v1054
    %v1057 = vadd.f32 %v1052, %v1054
    %v1058 = vlaneseq
    %v1059 = vand.u32 %v1058, 127
    %s1060 = sld [smem:[#allocation2]]
    %v1061 = vstv %s1060
    %s1062 = sld [smem:[#allocation2 + $0x1]]
    %v1063 = vstv %s1062
    %vm1064 = vcmp.lt.s32.totalorder %v1059, %v1061
    %vm1065 = vcmp.lt.s32.totalorder %v1059, %v1063
    %v1066 = vsel %vm1064, 0.0, -1e+09
    %v1067 = vsel %vm1065, 0.0, -1e+09
    %v1068 = vpack.c.bf16 %v1057, %v1056
    %v1069 = vpack.c.bf16 %v293, %v292
    %v1070 = vpack.c.bf16 %v295, %v294
    %v1071 = vld [vmem:[#allocation10] sm:$0xf]
    %v1072 = vld [vmem:[#allocation10 + $0x4] sm:$0xf]
    %v1073 = vld [vmem:[#allocation10 + $0x8] sm:$0xf]
    %v1074 = vld [vmem:[#allocation10 + $0xc] sm:$0xf]
    %v1075 = vld [vmem:[%s13] sm:$0x1]
    %v1077 = vperm.slane %v1075, 0
    %v1083 = vunpack.c.l.b16 %v1071
    %v1084 = vunpack.c.l.b16 %v1072
    %v1085 = vunpack.c.l.b16 %v1073
    %v1086 = vunpack.c.l.b16 %v1074
    %v1087 = vpack.c.b16 %v1084, %v1083
    %v1088 = vpack.c.b16 %v1086, %v1085
    %v1092 = vsel %vm323, %v1068, 0
    %1094 = vmatpush.bf16.msra.mxu0 0
    %1095 = vmatpush.bf16.msra.mxu0 0
    %1096 = vmatpush.bf16.msra.mxu0 0
    %1097 = vmatpush.bf16.msra.mxu0 0
    %1098 = vmatpush.bf16.msra.mxu0 0
    %1099 = vmatpush.bf16.msra.mxu0 0
    %1100 = vmatpush.bf16.msra.mxu0 %v1088
    %1101 = vmatpush.bf16.msra.mxu0 %v1087
    %1102 = vmatmul.bf16.gmra.mxu0 %v1092
    %v1103 = vpop.f32.mrf.mxu0
    %v1104 = vadd.f32 %v1077, %v1103
    %v1105 = vpop.f32.mrf.mxu0
    %v1106 = vadd.f32 %v1077, %v1105
    %1107 = vdwg.mxu0
    %v1108 = vld [vmem:[#allocation12] sm:$0xf]
    %v1109 = vld [vmem:[#allocation12 + $0x4] sm:$0xf]
    %v1110 = vld [vmem:[#allocation12 + $0x8] sm:$0xf]
    %v1111 = vld [vmem:[#allocation12 + $0xc] sm:$0xf]
    %v1112 = vld [vmem:[%s15] sm:$0x1]
    %v1114 = vperm.slane %v1112, 0
    %v1120 = vunpack.c.l.b16 %v1108
    %v1121 = vunpack.c.l.b16 %v1109
    %v1122 = vunpack.c.l.b16 %v1110
    %v1123 = vunpack.c.l.b16 %v1111
    %v1124 = vpack.c.b16 %v1121, %v1120
    %v1125 = vpack.c.b16 %v1123, %v1122
    %v1129 = vsel %vm323, %v1069, 0
    %v1132 = vsel %vm323, %v1070, 0
    %1134 = vmatpush.bf16.msra.mxu0 0
    %1135 = vmatpush.bf16.msra.mxu0 0
    %1136 = vmatpush.bf16.msra.mxu0 0
    %1137 = vmatpush.bf16.msra.mxu0 0
    %1138 = vmatpush.bf16.msra.mxu0 0
    %1139 = vmatpush.bf16.msra.mxu0 0
    %1140 = vmatpush.bf16.msra.mxu0 %v1125
    %1141 = vmatpush.bf16.msra.mxu0 %v1124
    %1142 = vmatmul.bf16.gmra.mxu0 %v1129
    %v1143 = vpop.f32.mrf.mxu0
    %v1144 = vadd.f32 %v1114, %v1143
    %v1145 = vpop.f32.mrf.mxu0
    %v1146 = vadd.f32 %v1114, %v1145
    %1147 = vmatmul.bf16.gmra.mxu0 %v1132
    %v1148 = vpop.f32.mrf.mxu0
    %v1149 = vadd.f32 %v1114, %v1148
    %v1150 = vpop.f32.mrf.mxu0
    %v1151 = vadd.f32 %v1114, %v1150
    %1152 = vdwg.mxu0
    %v1153 = vld [vmem:[#allocation13] sm:$0xf]
    %v1154 = vld [vmem:[#allocation13 + $0x4] sm:$0xf]
    %v1155 = vld [vmem:[#allocation13 + $0x8] sm:$0xf]
    %v1156 = vld [vmem:[#allocation13 + $0xc] sm:$0xf]
    %v1157 = vld [vmem:[%s17] sm:$0x1]
    %v1159 = vperm.slane %v1157, 0
    %v1165 = vunpack.c.l.b16 %v1153
    %v1166 = vunpack.c.l.b16 %v1154
    %v1167 = vunpack.c.l.b16 %v1155
    %v1168 = vunpack.c.l.b16 %v1156
    %v1169 = vpack.c.b16 %v1166, %v1165
    %v1170 = vpack.c.b16 %v1168, %v1167
    %1173 = vmatpush.bf16.msra.mxu0 0
    %1174 = vmatpush.bf16.msra.mxu0 0
    %1175 = vmatpush.bf16.msra.mxu0 0
    %1176 = vmatpush.bf16.msra.mxu0 0
    %1177 = vmatpush.bf16.msra.mxu0 0
    %1178 = vmatpush.bf16.msra.mxu0 0
    %1179 = vmatpush.bf16.msra.mxu0 %v1170
    %1180 = vmatpush.bf16.msra.mxu0 %v1169
    %1181 = vmatmul.bf16.gmra.mxu0 %v1129
    %v1182 = vpop.f32.mrf.mxu0
    %v1183 = vadd.f32 %v1159, %v1182
    %v1184 = vpop.f32.mrf.mxu0
    %v1185 = vadd.f32 %v1159, %v1184
    %1186 = vmatmul.bf16.gmra.mxu0 %v1132
    %v1187 = vpop.f32.mrf.mxu0
    %v1188 = vadd.f32 %v1159, %v1187
    %v1189 = vpop.f32.mrf.mxu0
    %v1190 = vadd.f32 %v1159, %v1189
    %1191 = vdwg.mxu0
    %v1192 = vpack.c.bf16 %v1144, %v1144
    %v1193 = vpack.c.bf16 %v1146, %v1146
    %v1194 = vpack.c.bf16 %v1149, %v1149
    %v1195 = vpack.c.bf16 %v1151, %v1151
    %v1196 = vmul.f32 %v1104, %v412
    %v1197 = vmul.f32 %v1106, %v412
    %v1198 = vpack.c.bf16 %v1196, %v1196
    %v1199 = vpack.c.bf16 %v1197, %v1197
    %v1200 = vmul.f32 %v1183, %v412
    %v1201 = vmul.f32 %v1185, %v412
    %v1202 = vmul.f32 %v1188, %v412
    %v1203 = vmul.f32 %v1190, %v412
    %v1204 = vpack.c.bf16 %v1200, %v1200
    %v1205 = vpack.c.bf16 %v1201, %v1201
    %v1206 = vpack.c.bf16 %v1202, %v1202
    %v1207 = vpack.c.bf16 %v1203, %v1203
    %v1210 = vunpack.c.l.b16 %v1192
    %v1211 = vunpack.c.l.b16 %v1193
    %v1212 = vpack.c.b16 %v1211, %v1210
    %v1214 = vsel %vm323, %v1198, 0
    %v1217 = vsel %vm323, %v1212, 0
    %1219 = vmatpush.bf16.xpose.msra.mxu0 0
    %1220 = vmatpush.bf16.xpose.msra.mxu0 0
    %1221 = vmatpush.bf16.xpose.msra.mxu0 0
    %1222 = vmatpush.bf16.xpose.msra.mxu0 0
    %1223 = vmatpush.bf16.xpose.msra.mxu0 0
    %1224 = vmatpush.bf16.xpose.msra.mxu0 0
    %1225 = vmatpush.bf16.xpose.msra.mxu0 0
    %1226 = vmatpush.bf16.xpose.msra.mxu0 %v1217
    %1227 = vmatmul.bf16.gmra.mxu0 %v1214
    %v1228 = vpop.f32.mrf.mxu0
    %v1229 = vadd.f32 0.0, %v1228
    %v1230 = vpop.f32.mrf.mxu0
    %1231 = vdwg.mxu0
    %v1234 = vunpack.c.l.b16 %v1194
    %v1235 = vunpack.c.l.b16 %v1195
    %v1236 = vpack.c.b16 %v1235, %v1234
    %v1238 = vsel %vm323, %v1199, 0
    %v1241 = vsel %vm323, %v1236, 0
    %1243 = vmatpush.bf16.xpose.msra.mxu0 0
    %1244 = vmatpush.bf16.xpose.msra.mxu0 0
    %1245 = vmatpush.bf16.xpose.msra.mxu0 0
    %1246 = vmatpush.bf16.xpose.msra.mxu0 0
    %1247 = vmatpush.bf16.xpose.msra.mxu0 0
    %1248 = vmatpush.bf16.xpose.msra.mxu0 0
    %1249 = vmatpush.bf16.xpose.msra.mxu0 0
    %1250 = vmatpush.bf16.xpose.msra.mxu0 %v1241
    %1251 = vmatmul.bf16.gmra.mxu0 %v1238
    %v1252 = vpop.f32.mrf.mxu0
    %v1253 = vadd.f32 0.0, %v1252
    %v1254 = vpop.f32.mrf.mxu0
    %1255 = vdwg.mxu0
    %v1256 = vmul.f32 %v1229, 0.35355338
    %v1257 = vmul.f32 %v1253, 0.35355338
    %v1258 = vadd.f32 %v1256, %v1066
    %v1259 = vadd.f32 %v1257, %v1067
    %vm1260 = vcmask 130048
    %v1261 = vsel %vm1260, %v1258, -inf
    %1262 = vmax.xlane.f32.xlu0 %v1261
    %v1263 = vpop.xlane.xlu0 %1262
    %v1264 = vsel %vm1260, %v1259, -inf
    %1265 = vmax.xlane.f32.xlu0 %v1264
    %v1266 = vpop.xlane.xlu0 %1265
    %v1267 = vsub.f32 %v1258, %v1263
    %v1268 = vsub.f32 %v1259, %v1266
    %v1269 = vmul.f32 %v1267, 1.442695
    %v1270 = vpow.pop %v1269
    %v1271 = vmul.f32 %v1268, 1.442695
    %v1272 = vpow.pop %v1271
    %v1273 = vsel %vm1260, %v1270, 0.0
    %1274 = vadd.xlane.f32.xlu0 %v1273
    %v1275 = vpop.xlane.xlu0 %1274
    %v1276 = vsel %vm1260, %v1272, 0.0
    %1277 = vadd.xlane.f32.xlu0 %v1276
    %v1278 = vpop.xlane.xlu0 %1277
    %v1279 = vrcp.pop %v1275
    %v1280 = vmul.f32 %v1275, %v1279
    %v1281 = vsub.f32 1.0, %v1280
    %v1282 = vmul.f32 %v1279, %v1281
    %v1283 = vadd.f32 %v1279, %v1282
    %vm1284 = vweird.f32 %v1275
    %vm1285 = vweird.f32 %v1279
    %vm1286 = vmor %vm1284, %vm1285
    %v1287 = vsel %vm1286, %v1279, %v1283
    %v1288 = vand.u32 2147483647, %v1275
    %vm1289 = vcmp.eq.f32.partialorder %v1288, 8.507059e+37
    %v1290 = vand.u32 %v1275, 2147483648
    %v1291 = vor.u32 1.1754944e-38, %v1290
    %v1292 = vsel %vm1289, %v1291, %v1287
    %v1293 = vmul.f32 %v1270, %v1292
    %v1294 = vrcp.pop %v1278
    %v1295 = vmul.f32 %v1278, %v1294
    %v1296 = vsub.f32 1.0, %v1295
    %v1297 = vmul.f32 %v1294, %v1296
    %v1298 = vadd.f32 %v1294, %v1297
    %vm1299 = vweird.f32 %v1278
    %vm1300 = vweird.f32 %v1294
    %vm1301 = vmor %vm1299, %vm1300
    %v1302 = vsel %vm1301, %v1294, %v1298
    %v1303 = vand.u32 2147483647, %v1278
    %vm1304 = vcmp.eq.f32.partialorder %v1303, 8.507059e+37
    %v1305 = vand.u32 %v1278, 2147483648
    %v1306 = vor.u32 1.1754944e-38, %v1305
    %v1307 = vsel %vm1304, %v1306, %v1302
    %v1308 = vmul.f32 %v1272, %v1307
    %v1309 = vpack.c.bf16 %v1293, %v1293
    %v1310 = vpack.c.bf16 %v1308, %v1308
    %v1311 = vmul.f32 %v1104, %v514
    %v1312 = vmul.f32 %v1106, %v514
    %v1313 = vpack.c.bf16 %v1311, %v1311
    %v1314 = vpack.c.bf16 %v1312, %v1312
    %v1315 = vmul.f32 %v1183, %v514
    %v1316 = vmul.f32 %v1185, %v514
    %v1317 = vmul.f32 %v1188, %v514
    %v1318 = vmul.f32 %v1190, %v514
    %v1319 = vpack.c.bf16 %v1315, %v1315
    %v1320 = vpack.c.bf16 %v1316, %v1316
    %v1321 = vpack.c.bf16 %v1317, %v1317
    %v1322 = vpack.c.bf16 %v1318, %v1318
    %v1324 = vsel %vm323, %v1313, 0
    %1326 = vmatpush.bf16.xpose.msra.mxu0 0
    %1327 = vmatpush.bf16.xpose.msra.mxu0 0
    %1328 = vmatpush.bf16.xpose.msra.mxu0 0
    %1329 = vmatpush.bf16.xpose.msra.mxu0 0
    %1330 = vmatpush.bf16.xpose.msra.mxu0 0
    %1331 = vmatpush.bf16.xpose.msra.mxu0 0
    %1332 = vmatpush.bf16.xpose.msra.mxu0 0
    %1333 = vmatpush.bf16.xpose.msra.mxu0 %v1217
    %1334 = vmatmul.bf16.gmra.mxu0 %v1324
    %v1335 = vpop.f32.mrf.mxu0
    %v1336 = vadd.f32 0.0, %v1335
    %v1337 = vpop.f32.mrf.mxu0
    %1338 = vdwg.mxu0
    %v1340 = vsel %vm323, %v1314, 0
    %1342 = vmatpush.bf16.xpose.msra.mxu0 0
    %1343 = vmatpush.bf16.xpose.msra.mxu0 0
    %1344 = vmatpush.bf16.xpose.msra.mxu0 0
    %1345 = vmatpush.bf16.xpose.msra.mxu0 0
    %1346 = vmatpush.bf16.xpose.msra.mxu0 0
    %1347 = vmatpush.bf16.xpose.msra.mxu0 0
    %1348 = vmatpush.bf16.xpose.msra.mxu0 0
    %1349 = vmatpush.bf16.xpose.msra.mxu0 %v1241
    %1350 = vmatmul.bf16.gmra.mxu0 %v1340
    %v1351 = vpop.f32.mrf.mxu0
    %v1352 = vadd.f32 0.0, %v1351
    %v1353 = vpop.f32.mrf.mxu0
    %1354 = vdwg.mxu0
    %v1355 = vmul.f32 %v1336, 0.35355338
    %v1356 = vmul.f32 %v1352, 0.35355338
    %v1357 = vadd.f32 %v1355, %v1066
    %v1358 = vadd.f32 %v1356, %v1067
    %v1359 = vsel %vm1260, %v1357, -inf
    %1360 = vmax.xlane.f32.xlu0 %v1359
    %v1361 = vpop.xlane.xlu0 %1360
    %v1362 = vsel %vm1260, %v1358, -inf
    %1363 = vmax.xlane.f32.xlu0 %v1362
    %v1364 = vpop.xlane.xlu0 %1363
    %v1365 = vsub.f32 %v1357, %v1361
    %v1366 = vsub.f32 %v1358, %v1364
    %v1367 = vmul.f32 %v1365, 1.442695
    %v1368 = vpow.pop %v1367
    %v1369 = vmul.f32 %v1366, 1.442695
    %v1370 = vpow.pop %v1369
    %v1371 = vsel %vm1260, %v1368, 0.0
    %1372 = vadd.xlane.f32.xlu0 %v1371
    %v1373 = vpop.xlane.xlu0 %1372
    %v1374 = vsel %vm1260, %v1370, 0.0
    %1375 = vadd.xlane.f32.xlu0 %v1374
    %v1376 = vpop.xlane.xlu0 %1375
    %v1377 = vrcp.pop %v1373
    %v1378 = vmul.f32 %v1373, %v1377
    %v1379 = vsub.f32 1.0, %v1378
    %v1380 = vmul.f32 %v1377, %v1379
    %v1381 = vadd.f32 %v1377, %v1380
    %vm1382 = vweird.f32 %v1373
    %vm1383 = vweird.f32 %v1377
    %vm1384 = vmor %vm1382, %vm1383
    %v1385 = vsel %vm1384, %v1377, %v1381
    %v1386 = vand.u32 2147483647, %v1373
    %vm1387 = vcmp.eq.f32.partialorder %v1386, 8.507059e+37
    %v1388 = vand.u32 %v1373, 2147483648
    %v1389 = vor.u32 1.1754944e-38, %v1388
    %v1390 = vsel %vm1387, %v1389, %v1385
    %v1391 = vmul.f32 %v1368, %v1390
    %v1392 = vrcp.pop %v1376
    %v1393 = vmul.f32 %v1376, %v1392
    %v1394 = vsub.f32 1.0, %v1393
    %v1395 = vmul.f32 %v1392, %v1394
    %v1396 = vadd.f32 %v1392, %v1395
    %vm1397 = vweird.f32 %v1376
    %vm1398 = vweird.f32 %v1392
    %vm1399 = vmor %vm1397, %vm1398
    %v1400 = vsel %vm1399, %v1392, %v1396
    %v1401 = vand.u32 2147483647, %v1376
    %vm1402 = vcmp.eq.f32.partialorder %v1401, 8.507059e+37
    %v1403 = vand.u32 %v1376, 2147483648
    %v1404 = vor.u32 1.1754944e-38, %v1403
    %v1405 = vsel %vm1402, %v1404, %v1400
    %v1406 = vmul.f32 %v1370, %v1405
    %v1407 = vpack.c.bf16 %v1391, %v1391
    %v1408 = vpack.c.bf16 %v1406, %v1406
    %v1411 = vunpack.c.l.b16 %v1319
    %v1412 = vunpack.c.l.b16 %v1320
    %v1413 = vpack.c.b16 %v1412, %v1411
    %v1416 = vsel %vm1260, %v1407, 0
    %1418 = vmatpush.bf16.msra.mxu0 0
    %1419 = vmatpush.bf16.msra.mxu0 0
    %1420 = vmatpush.bf16.msra.mxu0 0
    %1421 = vmatpush.bf16.msra.mxu0 0
    %1422 = vmatpush.bf16.msra.mxu0 0
    %1423 = vmatpush.bf16.msra.mxu0 0
    %1424 = vmatpush.bf16.msra.mxu0 0
    %1425 = vmatpush.bf16.msra.mxu0 %v1413
    %1426 = vmatmul.bf16.gmra.mxu0 %v1416
    %v1427 = vpop.f32.mrf.mxu0
    %v1428 = vadd.f32 0.0, %v1427
    %v1429 = vpop.f32.mrf.mxu0
    %1430 = vdwg.mxu0
    %v1433 = vunpack.c.l.b16 %v1321
    %v1434 = vunpack.c.l.b16 %v1322
    %v1435 = vpack.c.b16 %v1434, %v1433
    %v1438 = vsel %vm1260, %v1408, 0
    %1440 = vmatpush.bf16.msra.mxu0 0
    %1441 = vmatpush.bf16.msra.mxu0 0
    %1442 = vmatpush.bf16.msra.mxu0 0
    %1443 = vmatpush.bf16.msra.mxu0 0
    %1444 = vmatpush.bf16.msra.mxu0 0
    %1445 = vmatpush.bf16.msra.mxu0 0
    %1446 = vmatpush.bf16.msra.mxu0 0
    %1447 = vmatpush.bf16.msra.mxu0 %v1435
    %1448 = vmatmul.bf16.gmra.mxu0 %v1438
    %v1449 = vpop.f32.mrf.mxu0
    %v1450 = vadd.f32 0.0, %v1449
    %v1451 = vpop.f32.mrf.mxu0
    %1452 = vdwg.mxu0
    %v1453 = vmul.f32 %v1104, %v648
    %v1454 = vmul.f32 %v1106, %v648
    %v1455 = vpack.c.bf16 %v1453, %v1453
    %v1456 = vpack.c.bf16 %v1454, %v1454
    %v1457 = vmul.f32 %v1183, %v648
    %v1458 = vmul.f32 %v1185, %v648
    %v1459 = vmul.f32 %v1188, %v648
    %v1460 = vmul.f32 %v1190, %v648
    %v1461 = vpack.c.bf16 %v1457, %v1457
    %v1462 = vpack.c.bf16 %v1458, %v1458
    %v1463 = vpack.c.bf16 %v1459, %v1459
    %v1464 = vpack.c.bf16 %v1460, %v1460
    %v1466 = vsel %vm323, %v1455, 0
    %1468 = vmatpush.bf16.xpose.msra.mxu0 0
    %1469 = vmatpush.bf16.xpose.msra.mxu0 0
    %1470 = vmatpush.bf16.xpose.msra.mxu0 0
    %1471 = vmatpush.bf16.xpose.msra.mxu0 0
    %1472 = vmatpush.bf16.xpose.msra.mxu0 0
    %1473 = vmatpush.bf16.xpose.msra.mxu0 0
    %1474 = vmatpush.bf16.xpose.msra.mxu0 0
    %1475 = vmatpush.bf16.xpose.msra.mxu0 %v1217
    %1476 = vmatmul.bf16.gmra.mxu0 %v1466
    %v1477 = vpop.f32.mrf.mxu0
    %v1478 = vadd.f32 0.0, %v1477
    %v1479 = vpop.f32.mrf.mxu0
    %1480 = vdwg.mxu0
    %v1482 = vsel %vm323, %v1456, 0
    %1484 = vmatpush.bf16.xpose.msra.mxu0 0
    %1485 = vmatpush.bf16.xpose.msra.mxu0 0
    %1486 = vmatpush.bf16.xpose.msra.mxu0 0
    %1487 = vmatpush.bf16.xpose.msra.mxu0 0
    %1488 = vmatpush.bf16.xpose.msra.mxu0 0
    %1489 = vmatpush.bf16.xpose.msra.mxu0 0
    %1490 = vmatpush.bf16.xpose.msra.mxu0 0
    %1491 = vmatpush.bf16.xpose.msra.mxu0 %v1241
    %1492 = vmatmul.bf16.gmra.mxu0 %v1482
    %v1493 = vpop.f32.mrf.mxu0
    %v1494 = vadd.f32 0.0, %v1493
    %v1495 = vpop.f32.mrf.mxu0
    %1496 = vdwg.mxu0
    %v1497 = vmul.f32 %v1478, 0.35355338
    %v1498 = vmul.f32 %v1494, 0.35355338
    %v1499 = vadd.f32 %v1497, %v1066
    %v1500 = vadd.f32 %v1498, %v1067
    %v1501 = vsel %vm1260, %v1499, -inf
    %1502 = vmax.xlane.f32.xlu0 %v1501
    %v1503 = vpop.xlane.xlu0 %1502
    %v1504 = vsel %vm1260, %v1500, -inf
    %1505 = vmax.xlane.f32.xlu0 %v1504
    %v1506 = vpop.xlane.xlu0 %1505
    %v1507 = vsub.f32 %v1499, %v1503
    %v1508 = vsub.f32 %v1500, %v1506
    %v1509 = vmul.f32 %v1507, 1.442695
    %v1510 = vpow.pop %v1509
    %v1511 = vmul.f32 %v1508, 1.442695
    %v1512 = vpow.pop %v1511
    %v1513 = vsel %vm1260, %v1510, 0.0
    %1514 = vadd.xlane.f32.xlu0 %v1513
    %v1515 = vpop.xlane.xlu0 %1514
    %v1516 = vsel %vm1260, %v1512, 0.0
    %1517 = vadd.xlane.f32.xlu0 %v1516
    %v1518 = vpop.xlane.xlu0 %1517
    %v1519 = vrcp.pop %v1515
    %v1520 = vmul.f32 %v1515, %v1519
    %v1521 = vsub.f32 1.0, %v1520
    %v1522 = vmul.f32 %v1519, %v1521
    %v1523 = vadd.f32 %v1519, %v1522
    %vm1524 = vweird.f32 %v1515
    %vm1525 = vweird.f32 %v1519
    %vm1526 = vmor %vm1524, %vm1525
    %v1527 = vsel %vm1526, %v1519, %v1523
    %v1528 = vand.u32 2147483647, %v1515
    %vm1529 = vcmp.eq.f32.partialorder %v1528, 8.507059e+37
    %v1530 = vand.u32 %v1515, 2147483648
    %v1531 = vor.u32 1.1754944e-38, %v1530
    %v1532 = vsel %vm1529, %v1531, %v1527
    %v1533 = vmul.f32 %v1510, %v1532
    %v1534 = vrcp.pop %v1518
    %v1535 = vmul.f32 %v1518, %v1534
    %v1536 = vsub.f32 1.0, %v1535
    %v1537 = vmul.f32 %v1534, %v1536
    %v1538 = vadd.f32 %v1534, %v1537
    %vm1539 = vweird.f32 %v1518
    %vm1540 = vweird.f32 %v1534
    %vm1541 = vmor %vm1539, %vm1540
    %v1542 = vsel %vm1541, %v1534, %v1538
    %v1543 = vand.u32 2147483647, %v1518
    %vm1544 = vcmp.eq.f32.partialorder %v1543, 8.507059e+37
    %v1545 = vand.u32 %v1518, 2147483648
    %v1546 = vor.u32 1.1754944e-38, %v1545
    %v1547 = vsel %vm1544, %v1546, %v1542
    %v1548 = vmul.f32 %v1512, %v1547
    %v1549 = vpack.c.bf16 %v1533, %v1533
    %v1550 = vpack.c.bf16 %v1548, %v1548
    %v1551 = vmul.f32 %v1104, %v743
    %v1552 = vmul.f32 %v1106, %v743
    %v1553 = vpack.c.bf16 %v1551, %v1551
    %v1554 = vpack.c.bf16 %v1552, %v1552
    %v1555 = vmul.f32 %v1183, %v743
    %v1556 = vmul.f32 %v1185, %v743
    %v1557 = vmul.f32 %v1188, %v743
    %v1558 = vmul.f32 %v1190, %v743
    %v1559 = vpack.c.bf16 %v1555, %v1555
    %v1560 = vpack.c.bf16 %v1556, %v1556
    %v1561 = vpack.c.bf16 %v1557, %v1557
    %v1562 = vpack.c.bf16 %v1558, %v1558
    %v1564 = vsel %vm323, %v1553, 0
    %1566 = vmatpush.bf16.xpose.msra.mxu0 0
    %1567 = vmatpush.bf16.xpose.msra.mxu0 0
    %1568 = vmatpush.bf16.xpose.msra.mxu0 0
    %1569 = vmatpush.bf16.xpose.msra.mxu0 0
    %1570 = vmatpush.bf16.xpose.msra.mxu0 0
    %1571 = vmatpush.bf16.xpose.msra.mxu0 0
    %1572 = vmatpush.bf16.xpose.msra.mxu0 0
    %1573 = vmatpush.bf16.xpose.msra.mxu0 %v1217
    %1574 = vmatmul.bf16.gmra.mxu0 %v1564
    %v1575 = vpop.f32.mrf.mxu0
    %v1576 = vadd.f32 0.0, %v1575
    %v1577 = vpop.f32.mrf.mxu0
    %1578 = vdwg.mxu0
    %v1580 = vsel %vm323, %v1554, 0
    %1582 = vmatpush.bf16.xpose.msra.mxu0 0
    %1583 = vmatpush.bf16.xpose.msra.mxu0 0
    %1584 = vmatpush.bf16.xpose.msra.mxu0 0
    %1585 = vmatpush.bf16.xpose.msra.mxu0 0
    %1586 = vmatpush.bf16.xpose.msra.mxu0 0
    %1587 = vmatpush.bf16.xpose.msra.mxu0 0
    %1588 = vmatpush.bf16.xpose.msra.mxu0 0
    %1589 = vmatpush.bf16.xpose.msra.mxu0 %v1241
    %1590 = vmatmul.bf16.gmra.mxu0 %v1580
    %v1591 = vpop.f32.mrf.mxu0
    %v1592 = vadd.f32 0.0, %v1591
    %v1593 = vpop.f32.mrf.mxu0
    %1594 = vdwg.mxu0
    %v1595 = vmul.f32 %v1576, 0.35355338
    %v1596 = vmul.f32 %v1592, 0.35355338
    %v1597 = vadd.f32 %v1595, %v1066
    %v1598 = vadd.f32 %v1596, %v1067
    %v1599 = vsel %vm1260, %v1597, -inf
    %1600 = vmax.xlane.f32.xlu0 %v1599
    %v1601 = vpop.xlane.xlu0 %1600
    %v1602 = vsel %vm1260, %v1598, -inf
    %1603 = vmax.xlane.f32.xlu0 %v1602
    %v1604 = vpop.xlane.xlu0 %1603
    %v1605 = vsub.f32 %v1597, %v1601
    %v1606 = vsub.f32 %v1598, %v1604
    %v1607 = vmul.f32 %v1605, 1.442695
    %v1608 = vpow.pop %v1607
    %v1609 = vmul.f32 %v1606, 1.442695
    %v1610 = vpow.pop %v1609
    %v1611 = vsel %vm1260, %v1608, 0.0
    %1612 = vadd.xlane.f32.xlu0 %v1611
    %v1613 = vpop.xlane.xlu0 %1612
    %v1614 = vsel %vm1260, %v1610, 0.0
    %1615 = vadd.xlane.f32.xlu0 %v1614
    %v1616 = vpop.xlane.xlu0 %1615
    %v1617 = vrcp.pop %v1613
    %v1618 = vmul.f32 %v1613, %v1617
    %v1619 = vsub.f32 1.0, %v1618
    %v1620 = vmul.f32 %v1617, %v1619
    %v1621 = vadd.f32 %v1617, %v1620
    %vm1622 = vweird.f32 %v1613
    %vm1623 = vweird.f32 %v1617
    %vm1624 = vmor %vm1622, %vm1623
    %v1625 = vsel %vm1624, %v1617, %v1621
    %v1626 = vand.u32 2147483647, %v1613
    %vm1627 = vcmp.eq.f32.partialorder %v1626, 8.507059e+37
    %v1628 = vand.u32 %v1613, 2147483648
    %v1629 = vor.u32 1.1754944e-38, %v1628
    %v1630 = vsel %vm1627, %v1629, %v1625
    %v1631 = vmul.f32 %v1608, %v1630
    %v1632 = vrcp.pop %v1616
    %v1633 = vmul.f32 %v1616, %v1632
    %v1634 = vsub.f32 1.0, %v1633
    %v1635 = vmul.f32 %v1632, %v1634
    %v1636 = vadd.f32 %v1632, %v1635
    %vm1637 = vweird.f32 %v1616
    %vm1638 = vweird.f32 %v1632
    %vm1639 = vmor %vm1637, %vm1638
    %v1640 = vsel %vm1639, %v1632, %v1636
    %v1641 = vand.u32 2147483647, %v1616
    %vm1642 = vcmp.eq.f32.partialorder %v1641, 8.507059e+37
    %v1643 = vand.u32 %v1616, 2147483648
    %v1644 = vor.u32 1.1754944e-38, %v1643
    %v1645 = vsel %vm1642, %v1644, %v1640
    %v1646 = vmul.f32 %v1610, %v1645
    %v1647 = vpack.c.bf16 %v1631, %v1631
    %v1648 = vpack.c.bf16 %v1646, %v1646
    %v1651 = vunpack.c.l.b16 %v1559
    %v1652 = vunpack.c.l.b16 %v1560
    %v1653 = vpack.c.b16 %v1652, %v1651
    %v1656 = vsel %vm1260, %v1647, 0
    %1658 = vmatpush.bf16.msra.mxu0 0
    %1659 = vmatpush.bf16.msra.mxu0 0
    %1660 = vmatpush.bf16.msra.mxu0 0
    %1661 = vmatpush.bf16.msra.mxu0 0
    %1662 = vmatpush.bf16.msra.mxu0 0
    %1663 = vmatpush.bf16.msra.mxu0 0
    %1664 = vmatpush.bf16.msra.mxu0 0
    %1665 = vmatpush.bf16.msra.mxu0 %v1653
    %1666 = vmatmul.bf16.gmra.mxu0 %v1656
    %v1667 = vpop.f32.mrf.mxu0
    %v1668 = vadd.f32 0.0, %v1667
    %v1669 = vpop.f32.mrf.mxu0
    %1670 = vdwg.mxu0
    %v1673 = vunpack.c.l.b16 %v1561
    %v1674 = vunpack.c.l.b16 %v1562
    %v1675 = vpack.c.b16 %v1674, %v1673
    %v1678 = vsel %vm1260, %v1648, 0
    %1680 = vmatpush.bf16.msra.mxu0 0
    %1681 = vmatpush.bf16.msra.mxu0 0
    %1682 = vmatpush.bf16.msra.mxu0 0
    %1683 = vmatpush.bf16.msra.mxu0 0
    %1684 = vmatpush.bf16.msra.mxu0 0
    %1685 = vmatpush.bf16.msra.mxu0 0
    %1686 = vmatpush.bf16.msra.mxu0 0
    %1687 = vmatpush.bf16.msra.mxu0 %v1675
    %1688 = vmatmul.bf16.gmra.mxu0 %v1678
    %v1689 = vpop.f32.mrf.mxu0
    %v1690 = vadd.f32 0.0, %v1689
    %v1691 = vpop.f32.mrf.mxu0
    %1692 = vdwg.mxu0
    %v1695 = vunpack.c.l.b16 %v1204
    %v1696 = vunpack.c.l.b16 %v1205
    %v1697 = vpack.c.b16 %v1696, %v1695
    %v1700 = vsel %vm1260, %v1309, 0
    %1702 = vmatpush.bf16.msra.mxu0 0
    %1703 = vmatpush.bf16.msra.mxu0 0
    %1704 = vmatpush.bf16.msra.mxu0 0
    %1705 = vmatpush.bf16.msra.mxu0 0
    %1706 = vmatpush.bf16.msra.mxu0 0
    %1707 = vmatpush.bf16.msra.mxu0 0
    %1708 = vmatpush.bf16.msra.mxu0 0
    %1709 = vmatpush.bf16.msra.mxu0 %v1697
    %1710 = vmatmul.bf16.gmra.mxu0 %v1700
    %v1711 = vpop.f32.mrf.mxu0
    %v1712 = vadd.f32 %v1428, %v1711
    %v1713 = vpop.f32.mrf.mxu0
    %1714 = vdwg.mxu0
    %v1717 = vunpack.c.l.b16 %v1206
    %v1718 = vunpack.c.l.b16 %v1207
    %v1719 = vpack.c.b16 %v1718, %v1717
    %v1722 = vsel %vm1260, %v1310, 0
    %1724 = vmatpush.bf16.msra.mxu0 0
    %1725 = vmatpush.bf16.msra.mxu0 0
    %1726 = vmatpush.bf16.msra.mxu0 0
    %1727 = vmatpush.bf16.msra.mxu0 0
    %1728 = vmatpush.bf16.msra.mxu0 0
    %1729 = vmatpush.bf16.msra.mxu0 0
    %1730 = vmatpush.bf16.msra.mxu0 0
    %1731 = vmatpush.bf16.msra.mxu0 %v1719
    %1732 = vmatmul.bf16.gmra.mxu0 %v1722
    %v1733 = vpop.f32.mrf.mxu0
    %v1734 = vadd.f32 %v1450, %v1733
    %v1735 = vpop.f32.mrf.mxu0
    %1736 = vdwg.mxu0
    %v1739 = vunpack.c.l.b16 %v1461
    %v1740 = vunpack.c.l.b16 %v1462
    %v1741 = vpack.c.b16 %v1740, %v1739
    %v1744 = vsel %vm1260, %v1549, 0
    %1746 = vmatpush.bf16.msra.mxu0 0
    %1747 = vmatpush.bf16.msra.mxu0 0
    %1748 = vmatpush.bf16.msra.mxu0 0
    %1749 = vmatpush.bf16.msra.mxu0 0
    %1750 = vmatpush.bf16.msra.mxu0 0
    %1751 = vmatpush.bf16.msra.mxu0 0
    %1752 = vmatpush.bf16.msra.mxu0 0
    %1753 = vmatpush.bf16.msra.mxu0 %v1741
    %1754 = vmatmul.bf16.gmra.mxu0 %v1744
    %v1755 = vpop.f32.mrf.mxu0
    %v1756 = vadd.f32 %v1668, %v1755
    %v1757 = vpop.f32.mrf.mxu0
    %1758 = vdwg.mxu0
    %v1761 = vunpack.c.l.b16 %v1463
    %v1762 = vunpack.c.l.b16 %v1464
    %v1763 = vpack.c.b16 %v1762, %v1761
    %v1766 = vsel %vm1260, %v1550, 0
    %1768 = vmatpush.bf16.msra.mxu0 0
    %1769 = vmatpush.bf16.msra.mxu0 0
    %1770 = vmatpush.bf16.msra.mxu0 0
    %1771 = vmatpush.bf16.msra.mxu0 0
    %1772 = vmatpush.bf16.msra.mxu0 0
    %1773 = vmatpush.bf16.msra.mxu0 0
    %1774 = vmatpush.bf16.msra.mxu0 0
    %1775 = vmatpush.bf16.msra.mxu0 %v1763
    %1776 = vmatmul.bf16.gmra.mxu0 %v1766
    %v1777 = vpop.f32.mrf.mxu0
    %v1778 = vadd.f32 %v1690, %v1777
    %v1779 = vpop.f32.mrf.mxu0
    %1780 = vdwg.mxu0
    %v1781 = vadd.f32 %v1712, %v1756
    %v1782 = vadd.f32 %v1734, %v1778
    %v1783 = vpack.c.bf16 %v1782, %v1781
    %v1784 = vld [vmem:[#allocation15] sm:$0xf]
    %v1785 = vld [vmem:[#allocation15 + $0x4] sm:$0xf]
    %v1786 = vld [vmem:[#allocation15 + $0x8] sm:$0xf]
    %v1787 = vld [vmem:[#allocation15 + $0xc] sm:$0xf]
    %v1788 = vld [vmem:[#allocation16] sm:$0x1]
    %v1790 = vperm.slane %v1788, 0
    %v1796 = vunpack.c.l.b16 %v1784
    %v1797 = vunpack.c.l.b16 %v1785
    %v1798 = vunpack.c.l.b16 %v1786
    %v1799 = vunpack.c.l.b16 %v1787
    %v1800 = vpack.c.b16 %v1797, %v1796
    %v1801 = vpack.c.b16 %v1799, %v1798
    %v1805 = vsel %vm323, %v1783, 0
    %1807 = vmatpush.bf16.msra.mxu0 0
    %1808 = vmatpush.bf16.msra.mxu0 0
    %1809 = vmatpush.bf16.msra.mxu0 0
    %1810 = vmatpush.bf16.msra.mxu0 0
    %1811 = vmatpush.bf16.msra.mxu0 0
    %1812 = vmatpush.bf16.msra.mxu0 0
    %1813 = vmatpush.bf16.msra.mxu0 %v1801
    %1814 = vmatpush.bf16.msra.mxu0 %v1800
    %1815 = vmatmul.bf16.gmra.mxu0 %v1805
    %v1816 = vpop.f32.mrf.mxu0
    %v1817 = vadd.f32 %v1790, %v1816
    %v1818 = vpop.f32.mrf.mxu0
    %v1819 = vadd.f32 %v1790, %v1818
    %1820 = vdwg.mxu0
    %v1821 = vadd.f32 %v1056, %v1817
    %v1822 = vadd.f32 %v1057, %v1819
    %v1823 = vsel %vm323, %v1821, 0.0
    %1824 = vadd.xlane.f32.xlu0 %v1823
    %v1825 = vpop.xlane.xlu0 %1824
    %v1826 = vsel %vm323, %v1822, 0.0
    %1827 = vadd.xlane.f32.xlu0 %v1826
    %v1828 = vpop.xlane.xlu0 %1827
    %v1829 = vmul.f32 %v1825, %v1005
    %v1830 = vmul.f32 %v1828, %v1005
    %v1831 = vmul.f32 %v1821, %v1821
    %v1832 = vmul.f32 %v1822, %v1822
    %v1833 = vsel %vm323, %v1831, 0.0
    %1834 = vadd.xlane.f32.xlu0 %v1833
    %v1835 = vpop.xlane.xlu0 %1834
    %v1836 = vsel %vm323, %v1832, 0.0
    %1837 = vadd.xlane.f32.xlu0 %v1836
    %v1838 = vpop.xlane.xlu0 %1837
    %v1839 = vmul.f32 %v1835, %v1005
    %v1840 = vmul.f32 %v1838, %v1005
    %v1841 = vmul.f32 %v1829, %v1829
    %v1842 = vmul.f32 %v1830, %v1830
    %v1843 = vsub.f32 %v1839, %v1841
    %v1844 = vsub.f32 %v1840, %v1842
    %v1845 = vsub.f32 %v1821, %v1829
    %v1846 = vsub.f32 %v1822, %v1830
    %v1847 = vadd.f32 %v1843, 1e-05
    %v1848 = vadd.f32 %v1844, 1e-05
    %v1849 = vrsqrt.pop %v1847
    %v1850 = vmul.f32 %v1849, %v1847
    %v1851 = vmul.f32 %v1850, %v1849
    %v1852 = vmul.f32 0.5, %v1851
    %v1853 = vsub.f32 1.5, %v1852
    %v1854 = vmul.f32 %v1849, %v1853
    %vm1855 = vweird.f32 %v1847
    %vm1856 = vweird.f32 %v1849
    %vm1857 = vmor %vm1855, %vm1856
    %v1858 = vsel %vm1857, %v1849, %v1854
    %v1859 = vrsqrt.pop %v1848
    %v1860 = vmul.f32 %v1859, %v1848
    %v1861 = vmul.f32 %v1860, %v1859
    %v1862 = vmul.f32 0.5, %v1861
    %v1863 = vsub.f32 1.5, %v1862
    %v1864 = vmul.f32 %v1859, %v1863
    %vm1865 = vweird.f32 %v1848
    %vm1866 = vweird.f32 %v1859
    %vm1867 = vmor %vm1865, %vm1866
    %v1868 = vsel %vm1867, %v1859, %v1864
    %v1869 = vmul.f32 %v1845, %v1858
    %v1870 = vmul.f32 %v1846, %v1868
    %v1871 = vmul.f32 %v1869, %v1049
    %v1872 = vmul.f32 %v1870, %v1049
    %v1873 = vadd.f32 %v1871, %v1054
    %v1874 = vadd.f32 %v1872, %v1054
    %v1875 = vpack.c.bf16 %v1874, %v1873
    %v1876 = vld [vmem:[#allocation21] sm:$0xf]
    %v1877 = vld [vmem:[#allocation21 + $0x4] sm:$0xf]
    %v1878 = vld [vmem:[#allocation21 + $0x8] sm:$0xf]
    %v1879 = vld [vmem:[#allocation21 + $0xc] sm:$0xf]
    %v1880 = vld [vmem:[#allocation22] sm:$0x1]
    %v1882 = vperm.slane %v1880, 0
    %v1888 = vunpack.c.l.b16 %v1876
    %v1889 = vunpack.c.l.b16 %v1877
    %v1890 = vunpack.c.l.b16 %v1878
    %v1891 = vunpack.c.l.b16 %v1879
    %v1892 = vpack.c.b16 %v1889, %v1888
    %v1893 = vpack.c.b16 %v1891, %v1890
    %v1897 = vsel %vm323, %v1875, 0
    %1899 = vmatpush.bf16.msra.mxu0 0
    %1900 = vmatpush.bf16.msra.mxu0 0
    %1901 = vmatpush.bf16.msra.mxu0 0
    %1902 = vmatpush.bf16.msra.mxu0 0
    %1903 = vmatpush.bf16.msra.mxu0 0
    %1904 = vmatpush.bf16.msra.mxu0 0
    %1905 = vmatpush.bf16.msra.mxu0 %v1893
    %1906 = vmatpush.bf16.msra.mxu0 %v1892
    %1907 = vmatmul.bf16.gmra.mxu0 %v1897
    %v1908 = vpop.f32.mrf.mxu0
    %v1909 = vadd.f32 %v1882, %v1908
    %v1910 = vpop.f32.mrf.mxu0
    %v1911 = vadd.f32 %v1882, %v1910
    %1912 = vdwg.mxu0
    %v1913 = vmax.f32 %v1909, 0.0
    %v1914 = vmax.f32 %v1911, 0.0
    %v1915 = vpack.c.bf16 %v1914, %v1913
    %v1916 = vld [vmem:[%s24] sm:$0xf]
    %v1917 = vld [vmem:[%s24 + $0x4] sm:$0xf]
    %v1918 = vld [vmem:[%s24 + $0x8] sm:$0xf]
    %v1919 = vld [vmem:[%s24 + $0xc] sm:$0xf]
    %v1920 = vld [vmem:[%s24 + $0x10] sm:$0xf]
    %v1921 = vld [vmem:[%s24 + $0x14] sm:$0xf]
    %v1922 = vld [vmem:[%s24 + $0x18] sm:$0xf]
    %v1923 = vld [vmem:[%s24 + $0x1c] sm:$0xf]
    %v1924 = vld [vmem:[%s24 + $0x20] sm:$0xf]
    %v1925 = vld [vmem:[%s24 + $0x24] sm:$0xf]
    %v1926 = vld [vmem:[%s24 + $0x28] sm:$0xf]
    %v1927 = vld [vmem:[%s24 + $0x2c] sm:$0xf]
    %v1928 = vld [vmem:[%s24 + $0x30] sm:$0xf]
    %v1929 = vld [vmem:[%s24 + $0x34] sm:$0xf]
    %v1930 = vld [vmem:[%s24 + $0x38] sm:$0xf]
    %v1931 = vld [vmem:[%s24 + $0x3c] sm:$0xf]
    %v1932 = vld [vmem:[#allocation24] sm:$0x1]
    %v1934 = vperm.slane %v1932, 0
    %v1952 = vunpack.c.l.b16 %v1916
    %v1953 = vunpack.c.l.b16 %v1917
    %v1954 = vunpack.c.l.b16 %v1918
    %v1955 = vunpack.c.l.b16 %v1919
    %v1956 = vunpack.c.l.b16 %v1920
    %v1957 = vunpack.c.l.b16 %v1921
    %v1958 = vunpack.c.l.b16 %v1922
    %v1959 = vunpack.c.l.b16 %v1923
    %v1960 = vunpack.c.l.b16 %v1924
    %v1961 = vunpack.c.l.b16 %v1925
    %v1962 = vunpack.c.l.b16 %v1926
    %v1963 = vunpack.c.l.b16 %v1927
    %v1964 = vunpack.c.l.b16 %v1928
    %v1965 = vunpack.c.l.b16 %v1929
    %v1966 = vunpack.c.l.b16 %v1930
    %v1967 = vunpack.c.l.b16 %v1931
    %v1968 = vpack.c.b16 %v1953, %v1952
    %v1969 = vpack.c.b16 %v1955, %v1954
    %v1970 = vpack.c.b16 %v1957, %v1956
    %v1971 = vpack.c.b16 %v1959, %v1958
    %v1972 = vpack.c.b16 %v1961, %v1960
    %v1973 = vpack.c.b16 %v1963, %v1962
    %v1974 = vpack.c.b16 %v1965, %v1964
    %v1975 = vpack.c.b16 %v1967, %v1966
    %1984 = vmatpush.bf16.msra.mxu0 %v1975
    %1985 = vmatpush.bf16.msra.mxu0 %v1974
    %1986 = vmatpush.bf16.msra.mxu0 %v1973
    %1987 = vmatpush.bf16.msra.mxu0 %v1972
    %1988 = vmatpush.bf16.msra.mxu0 %v1971
    %1989 = vmatpush.bf16.msra.mxu0 %v1970
    %1990 = vmatpush.bf16.msra.mxu0 %v1969
    %1991 = vmatpush.bf16.msra.mxu0 %v1968
    %1992 = vmatmul.bf16.gmra.mxu0 %v1915
    %v1993 = vpop.f32.mrf.mxu0
    %v1994 = vadd.f32 %v1934, %v1993
    %v1995 = vpop.f32.mrf.mxu0
    %v1996 = vadd.f32 %v1934, %v1995
    %1997 = vdwg.mxu0
    %v1998 = vadd.f32 %v1873, %v1994
    %v1999 = vadd.f32 %v1874, %v1996
    %v2000 = vsel %vm323, %v1998, 0.0
    %2001 = vadd.xlane.f32.xlu0 %v2000
    %v2002 = vpop.xlane.xlu0 %2001
    %v2003 = vsel %vm323, %v1999, 0.0
    %2004 = vadd.xlane.f32.xlu0 %v2003
    %v2005 = vpop.xlane.xlu0 %2004
    %v2006 = vmul.f32 %v2002, %v1005
    %v2007 = vmul.f32 %v2005, %v1005
    %v2008 = vmul.f32 %v1998, %v1998
    %v2009 = vmul.f32 %v1999, %v1999
    %v2010 = vsel %vm323, %v2008, 0.0
    %2011 = vadd.xlane.f32.xlu0 %v2010
    %v2012 = vpop.xlane.xlu0 %2011
    %v2013 = vsel %vm323, %v2009, 0.0
    %2014 = vadd.xlane.f32.xlu0 %v2013
    %v2015 = vpop.xlane.xlu0 %2014
    %v2016 = vmul.f32 %v2012, %v1005
    %v2017 = vmul.f32 %v2015, %v1005
    %v2018 = vmul.f32 %v2006, %v2006
    %v2019 = vmul.f32 %v2007, %v2007
    %v2020 = vsub.f32 %v2016, %v2018
    %v2021 = vsub.f32 %v2017, %v2019
    %v2022 = vsub.f32 %v1998, %v2006
    %v2023 = vsub.f32 %v1999, %v2007
    %v2024 = vadd.f32 %v2020, 1e-05
    %v2025 = vadd.f32 %v2021, 1e-05
    %v2026 = vrsqrt.pop %v2024
    %v2027 = vmul.f32 %v2026, %v2024
    %v2028 = vmul.f32 %v2027, %v2026
    %v2029 = vmul.f32 0.5, %v2028
    %v2030 = vsub.f32 1.5, %v2029
    %v2031 = vmul.f32 %v2026, %v2030
    %vm2032 = vweird.f32 %v2024
    %vm2033 = vweird.f32 %v2026
    %vm2034 = vmor %vm2032, %vm2033
    %v2035 = vsel %vm2034, %v2026, %v2031
    %v2036 = vrsqrt.pop %v2025
    %v2037 = vmul.f32 %v2036, %v2025
    %v2038 = vmul.f32 %v2037, %v2036
    %v2039 = vmul.f32 0.5, %v2038
    %v2040 = vsub.f32 1.5, %v2039
    %v2041 = vmul.f32 %v2036, %v2040
    %vm2042 = vweird.f32 %v2025
    %vm2043 = vweird.f32 %v2036
    %vm2044 = vmor %vm2042, %vm2043
    %v2045 = vsel %vm2044, %v2036, %v2041
    %v2046 = vmul.f32 %v2022, %v2035
    %v2047 = vmul.f32 %v2023, %v2045
    %v2048 = vmul.f32 %v2046, %v1049
    %v2049 = vmul.f32 %v2047, %v1049
    %v2050 = vadd.f32 %v2048, %v1054
    %v2051 = vadd.f32 %v2049, %v1054
    %2052 = vst.msk [vmem:[#allocation25] sm:$0xff] %vm323, %v2050
    %2053 = vst.msk [vmem:[#allocation25 + $0x8] sm:$0xff] %vm323, %v2051
    // Predicated region
    $region162: #{tpu_custom_call.1} parent=1 // pred_check
      _
    $region163: #{tpu_custom_call.1} parent=1 // pred_check_branch
      %2055 = sbr.rel (0) target = $region165
    $region164: #{tpu_custom_call.1} parent=1 // pred_region
      %2057 = vsyncadd [#allocation4], 0
      %s2058 = sshll.u32 [#allocation25], 4
      %s2059 = int_to_ptr.vmem [resolvable:$true] %s2058
      %s2060 = sshll.u32 %s26, 4
      %s2061 = int_to_ptr.hbm [resolvable:$true] %s2060
      %2066 = dma.vmem_to_hbm [thread:$0]  %s2059, 256, %s2061, [#allocation4], 128, 128, 8
    $region165: #{tpu_custom_call.1} parent=1 // pred_fallthru
      _
    // Predicated region
    $region166: #{tpu_custom_call.1} parent=1 // pred_check
      _
    $region167: #{tpu_custom_call.1} parent=1 // pred_check_branch
      %2068 = sbr.rel (0) target = $region169
    $region168: #{tpu_custom_call.1} parent=1 // pred_region
      %2070 = dma.done [#allocation4], 256
    $region169: #{tpu_custom_call.1} parent=1 // pred_fallthru
      _
    %2071 = vsyncpa [#allocation3], 1
    %2072 = vsyncpa [#allocation8], 1
    %2073 = vsyncpa [#allocation11], 1
    %2074 = vsyncpa [#allocation14], 1
    %2075 = vsyncpa [#allocation17], 1
    %2076 = vsyncpa [#allocation20], 1
    %2077 = vsyncpa [#allocation23], 1
    %2078 = vsyncpa [#allocation4], 1
    %2079 = vsyncpa [#allocation5], 1

</llo_original>
